<compile_context>
chip_gen: v5e
topology: v5e:2x2
jax: 0.10.0
libtpu: 0.0.40
codegen_flags: <defaults>
</compile_context>

<pallas_src>
import functools

import jax
import jax.numpy as jnp
import numpy as np
from jax.experimental import pallas as pl
from jax.experimental.pallas import tpu as pltpu


def _round_up(n, m):
    return ((n + m - 1) // m) * m


# --------------------------------------------------------------------------- #
# Kernel
# --------------------------------------------------------------------------- #
def bilstm_predict_kernel(xp_ref, wih_ref, whh_ref, b_ref, wpf_ref, wpb_ref,
                          bp_ref, h0_ref, c0_ref, out_ref, hsf_ref, hsb_ref,
                          *, T, Bp, H):
    # xp_ref:  (T*Bp, 2F)  row (s*Bp+b) = [x[s,b,:], x[T-1-s,b,:]]
    # wih_ref: (2F, 8H)    rows 0:F -> fwd stripes, rows F:2F -> bwd stripes;
    #                      columns gate-major interleaved [i_f,i_b,f_f,f_b,g_f,g_b,o_f,o_b];
    #                      g columns pre-scaled by 2 (tanh-via-sigmoid identity).
    # whh_ref: (2H, 8H)    block-diagonal recurrent weights, same layout/scaling.
    # b_ref:   (1, 8H)     b_ih + b_hh, both directions (g columns pre-scaled).
    # wpf/wpb: (1, 1, H)   predict weights split per direction; bp_ref: (1, 1).
    # h0/c0:   (Bp, 2H)    fused initial state [fwd | bwd], batch padded to Bp.
    # out_ref: (T, Bp)
    # hsf/hsb: (T, Bp, 2H) per-step hidden states (fwd time order / bwd time order)
    H2 = 2 * H

    # ---- (1) hoisted input projections: one lane-dense matmul, biases folded.
    gi = (jnp.dot(xp_ref[...], wih_ref[...],
                  preferred_element_type=jnp.float32) + b_ref[...])   # (T*Bp, 8H)

    whh = whh_ref[...]              # (2H, 8H)
    h = h0_ref[...]                 # (Bp, 2H) = [h_fwd | h_bwd]
    c = c0_ref[...]                 # (Bp, 2H) = [c_fwd | c_bwd]

    # ---- (2) fused fwd+bwd recurrence, fully unrolled (T is static). --------
    # Per step: one MXU matmul, one full-vreg sigmoid (i/f/o + tanh(g) via the
    # 2*sigmoid(2x)-1 identity), one sigmoid for tanh(c).  Lane splits are
    # deferred to the epilogue; scratch stores use full-width aligned tiles.
    for s in range(T):
        gates = (jnp.dot(h, whh, preferred_element_type=jnp.float32)
                 + gi[s * Bp:(s + 1) * Bp, :])          # (Bp, 8H), one aligned tile
        sg = jax.nn.sigmoid(gates)                      # single EUP pass, 128 lanes
        i = sg[:, 0 * H2:1 * H2]                        # [i_f | i_b]
        f = sg[:, 1 * H2:2 * H2]                        # [f_f | f_b]
        g = 2.0 * sg[:, 2 * H2:3 * H2] - 1.0            # tanh(g_pre); g cols pre-scaled by 2
        o = sg[:, 3 * H2:4 * H2]                        # [o_f | o_b]
        c = f * c + i * g
        h = o * (2.0 * jax.nn.sigmoid(2.0 * c) - 1.0)   # tanh(c) via sigmoid identity
        hsf_ref[s] = h              # fwd half belongs to output time s
        hsb_ref[T - 1 - s] = h      # bwd half belongs to output time T-1-s

    # ---- (3) predict (Linear(2H,1)) + ReLU as VPU multiply + lane reduction.
    yf = jnp.sum(hsf_ref[...][:, :, :H] * wpf_ref[...], axis=-1)   # (T, Bp)
    yb = jnp.sum(hsb_ref[...][:, :, H:] * wpb_ref[...], axis=-1)   # (T, Bp)
    # TODO(synk): last dim Bp=8 (<128) -> masked vst; a lane-dense padded slab
    # would avoid it but is pure layout plumbing at this size.
    out_ref[...] = jnp.maximum(yf + yb + bp_ref[0, 0], 0.0)


# --------------------------------------------------------------------------- #
# Parameter fusion (run once, outside the per-call path)
# --------------------------------------------------------------------------- #
def fuse_params(params):
    """Fold / interleave the PyTorch-layout LSTM + predict params (pure glue)."""
    H = params["w_hh_f"].shape[-1]
    H8 = 8 * H
    B = params["h0"].shape[1]
    Bp = max(8, _round_up(B, 8))

    def interleave_cols(a_f, a_b):
        # a_f/a_b: (X, 4H), PyTorch gate order i,f,g,o along columns.
        # -> (X, 8H) gate-major interleaved columns [i_f,i_b,f_f,f_b,g_f,g_b,o_f,o_b].
        X = a_f.shape[0]
        return jnp.stack([a_f.reshape(X, 4, H), a_b.reshape(X, 4, H)],
                         axis=2).reshape(X, H8)

    wihf_T = params["w_ih_f"].T.astype(jnp.float32)     # (F, 4H)
    wihb_T = params["w_ih_b"].T.astype(jnp.float32)
    whhf_T = params["w_hh_f"].T.astype(jnp.float32)     # (H, 4H)
    whhb_T = params["w_hh_b"].T.astype(jnp.float32)
    bf = (params["b_ih_f"] + params["b_hh_f"])[None, :].astype(jnp.float32)
    bb = (params["b_ih_b"] + params["b_hh_b"])[None, :].astype(jnp.float32)

    zf = jnp.zeros_like(wihf_T)
    # rows 0:F multiply x[t] (fwd stripes), rows F:2F multiply x[T-1-t] (bwd)
    wih = jnp.concatenate([interleave_cols(wihf_T, zf),
                           interleave_cols(zf, wihb_T)], axis=0)     # (2F, 8H)

    zh = jnp.zeros_like(whhf_T)
    # block-diagonal: h_fwd rows feed fwd stripes only, h_bwd rows feed bwd only
    whh = jnp.concatenate([interleave_cols(whhf_T, zh),
                           interleave_cols(zh, whhb_T)], axis=0)     # (2H, 8H)

    b = interleave_cols(bf, bb)                                      # (1, 8H)

    # Pre-scale the g-gate columns by 2 so the kernel can recover tanh(g_pre)
    # from a single full-vreg sigmoid: tanh(x) = 2*sigmoid(2x) - 1.
    gscale = jnp.ones((H8,), jnp.float32).at[4 * H:6 * H].set(2.0)
    wih = wih * gscale
    whh = whh * gscale
    b = b * gscale

    wp = params["w_pred"].reshape(-1).astype(jnp.float32)            # (2H,)
    wpf = wp[:H].reshape(1, 1, H)
    wpb = wp[H:].reshape(1, 1, H)
    bp = params["b_pred"].reshape(1, 1).astype(jnp.float32)

    h0 = jnp.concatenate([params["h0"][0], params["h0"][1]], axis=-1)  # (B, 2H)
    c0 = jnp.concatenate([params["c0"][0], params["c0"][1]], axis=-1)
    # Pad batch to a full f32 sublane tile; padded rows never reach the output.
    h0 = jnp.pad(h0.astype(jnp.float32), ((0, Bp - B), (0, 0)))
    c0 = jnp.pad(c0.astype(jnp.float32), ((0, Bp - B), (0, 0)))
    return dict(wih=wih, whh=whh, b=b, wpf=wpf, wpb=wpb, bp=bp, h0=h0, c0=c0)


# --------------------------------------------------------------------------- #
# Forward wrapper (jitted end-to-end)
# --------------------------------------------------------------------------- #
@functools.partial(jax.jit, static_argnames=("sequence_len", "batch"))
def net_forward_fused(x, fused, *, sequence_len, batch):
    """Equivalent of Net.forward(x) given pre-fused params; returns (seq*batch,)."""
    x3 = x.reshape(sequence_len, batch, -1).astype(jnp.float32)
    T, B, F = x3.shape
    H = fused["whh"].shape[0] // 2
    Bp = fused["h0"].shape[0]

    # Pad batch to the sublane tile and pair each timestep with its
    # time-reversed partner so the kernel's single input matmul directly yields
    # the fused (fwd @ t, bwd @ T-1-t) schedule.  All of this glue fuses into
    # the same jitted program as the kernel.
    xpad = jnp.pad(x3, ((0, 0), (0, Bp - B), (0, 0)))
    x_pair = jnp.concatenate([xpad, xpad[::-1]], axis=-1).reshape(T * Bp, 2 * F)

    kernel = functools.partial(bilstm_predict_kernel, T=T, Bp=Bp, H=H)
    out = pl.pallas_call(
        kernel,
        out_shape=jax.ShapeDtypeStruct((T, Bp), jnp.float32),
        scratch_shapes=[
            pltpu.VMEM((T, Bp, 2 * H), jnp.float32),   # hidden states, fwd time order
            pltpu.VMEM((T, Bp, 2 * H), jnp.float32),   # hidden states, bwd time order
        ],
    )(x_pair, fused["wih"], fused["whh"], fused["b"], fused["wpf"],
      fused["wpb"], fused["bp"], fused["h0"], fused["c0"])
    return out[:, :B].reshape(-1)


def net_forward(x, params, sequence_len, batch):
    """One-shot convenience: fuse params then run the jitted forward."""
    return net_forward_fused(x, fuse_params(params),
                             sequence_len=sequence_len, batch=batch)


# --------------------------------------------------------------------------- #
# Parameters & pure-JAX reference
# --------------------------------------------------------------------------- #
def make_params(key, n_feature, n_hidden, batch):
    """Deterministic parameter init mirroring the shapes in Net.__init__."""
    H = n_hidden // 2  # hidden size per direction
    ks = jax.random.split(key, 12)

    def u(k, shape, fan):
        bound = 1.0 / np.sqrt(fan)
        return jax.random.uniform(k, shape, jnp.float32, -bound, bound)

    return dict(
        w_ih_f=u(ks[0], (4 * H, n_feature), H),
        w_hh_f=u(ks[1], (4 * H, H), H),
        b_ih_f=u(ks[2], (4 * H,), H),
        b_hh_f=u(ks[3], (4 * H,), H),
        w_ih_b=u(ks[4], (4 * H, n_feature), H),
        w_hh_b=u(ks[5], (4 * H, H), H),
        b_ih_b=u(ks[6], (4 * H,), H),
        b_hh_b=u(ks[7], (4 * H,), H),
        w_pred=u(ks[8], (1, n_hidden), n_hidden),
        b_pred=u(ks[9], (1,), n_hidden),
        # TODO(synk): deterministic stand-in for init_hidden_lstm()'s torch.randn
        h0=jax.random.normal(ks[10], (2, batch, H), jnp.float32),
        c0=jax.random.normal(ks[11], (2, batch, H), jnp.float32),
    )


def _lstm_cell(x_t, h, c, w_ih_T, w_hh_T, b):
    """Single-direction LSTM cell, PyTorch gate order (i,f,g,o). Reference only."""
    gates = (jnp.dot(x_t, w_ih_T, preferred_element_type=jnp.float32)
             + jnp.dot(h, w_hh_T, preferred_element_type=jnp.float32)
             + b)
    H = h.shape[-1]
    i = jax.nn.sigmoid(gates[:, 0 * H:1 * H])
    f = jax.nn.sigmoid(gates[:, 1 * H:2 * H])
    g = jnp.tanh(gates[:, 2 * H:3 * H])
    o = jax.nn.sigmoid(gates[:, 3 * H:4 * H])
    c_new = f * c + i * g
    h_new = o * jnp.tanh(c_new)
    return h_new, c_new


def reference_forward(x, params, sequence_len, batch):
    """Pure-JAX reference matching PyTorch bi-LSTM + Linear + ReLU semantics."""
    x = x.reshape(sequence_len, batch, -1).astype(jnp.float32)
    T, B, F = x.shape

    def run_dir(wih, whh, bih, bhh, h, c, reverse):
        steps = range(T - 1, -1, -1) if reverse else range(T)
        hs = [None] * T
        for t in steps:
            h, c = _lstm_cell(x[t], h, c, wih.T, whh.T, (bih + bhh)[None, :])
            hs[t] = h
        return jnp.stack(hs, axis=0)  # (T, B, H)

    hf = run_dir(params["w_ih_f"], params["w_hh_f"], params["b_ih_f"],
                 params["b_hh_f"], params["h0"][0], params["c0"][0], False)
    hb = run_dir(params["w_ih_b"], params["w_hh_b"], params["b_ih_b"],
                 params["b_hh_b"], params["h0"][1], params["c0"][1], True)
    hcat = jnp.concatenate([hf, hb], axis=-1)            # (T, B, 2H)
    y = jnp.einsum("tbh,oh->tbo", hcat, params["w_pred"]) + params["b_pred"]
    return jnp.maximum(y, 0.0).reshape(-1)


if __name__ == "__main__":
    n_feature, n_hidden, sequence_len, batch = 16, 32, 8, 2
    key = jax.random.PRNGKey(0)
    kx, kp = jax.random.split(key)

    x = jax.random.normal(kx, (sequence_len, batch, n_feature), jnp.float32)
    params = make_params(kp, n_feature, n_hidden, batch)

    # Param fusion hoisted out of the per-call path; the forward itself is one
    # jitted program (kernel + tiny layout glue).
    fused = jax.block_until_ready(fuse_params(params))
    out = net_forward_fused(x, fused, sequence_len=sequence_len, batch=batch)
    out = jax.block_until_ready(out)
    assert out.shape == (sequence_len * batch,)

    ref = reference_forward(x, params, sequence_len, batch)
    np.testing.assert_allclose(np.asarray(out), np.asarray(ref),
                               rtol=1e-4, atol=1e-4)
    print("KERNEL_OK")
</pallas_src>

<mosaic_0001>
module attributes {stable_mosaic.version = 11 : i64} {
  func.func @bilstm_predict_kernel(%arg0: memref<64x32xf32, #tpu.memory_space<vmem>>, %arg1: memref<32x128xf32, #tpu.memory_space<vmem>>, %arg2: memref<32x128xf32, #tpu.memory_space<vmem>>, %arg3: memref<1x128xf32, #tpu.memory_space<vmem>>, %arg4: memref<1x1x16xf32, #tpu.memory_space<vmem>>, %arg5: memref<1x1x16xf32, #tpu.memory_space<vmem>>, %arg6: memref<1x1xf32, #tpu.memory_space<vmem>>, %arg7: memref<8x32xf32, #tpu.memory_space<vmem>>, %arg8: memref<8x32xf32, #tpu.memory_space<vmem>>, %arg9: memref<8x8xf32, #tpu.memory_space<vmem>>, %arg10: memref<8x8x32xf32, #tpu.memory_space<vmem>>, %arg11: memref<8x8x32xf32, #tpu.memory_space<vmem>>) attributes {dimension_semantics = [], scalar_prefetch = 0 : i64, scratch_operands = 2 : i64, tpu.core_type = #tpu.core_type<tc>} {
    %c0 = arith.constant 0 : index
    %c0_0 = arith.constant 0 : index
    %0 = vector.load %arg0[%c0, %c0_0] : memref<64x32xf32, #tpu.memory_space<vmem>>, vector<64x32xf32>
    %c0_1 = arith.constant 0 : index
    %c0_2 = arith.constant 0 : index
    %1 = vector.load %arg1[%c0_1, %c0_2] : memref<32x128xf32, #tpu.memory_space<vmem>>, vector<32x128xf32>
    %cst = arith.constant dense<0.000000e+00> : vector<64x128xf32>
    %2 = tpu.matmul %0, %1, %cst {dimension_numbers = #tpu.dot_dimension_numbers<[1], [0], [0], [1], [0, 0, 1, 1], [], []>} : vector<64x32xf32>, vector<32x128xf32>, vector<64x128xf32> -> vector<64x128xf32>
    %c0_3 = arith.constant 0 : index
    %c0_4 = arith.constant 0 : index
    %3 = vector.load %arg3[%c0_3, %c0_4] : memref<1x128xf32, #tpu.memory_space<vmem>>, vector<1x128xf32>
    %4 = vector.broadcast %3 : vector<1x128xf32> to vector<64x128xf32>
    %5 = arith.addf %2, %4 : vector<64x128xf32>
    %c0_5 = arith.constant 0 : index
    %c0_6 = arith.constant 0 : index
    %6 = vector.load %arg2[%c0_5, %c0_6] : memref<32x128xf32, #tpu.memory_space<vmem>>, vector<32x128xf32>
    %c0_7 = arith.constant 0 : index
    %c0_8 = arith.constant 0 : index
    %7 = vector.load %arg7[%c0_7, %c0_8] : memref<8x32xf32, #tpu.memory_space<vmem>>, vector<8x32xf32>
    %c0_9 = arith.constant 0 : index
    %c0_10 = arith.constant 0 : index
    %8 = vector.load %arg8[%c0_9, %c0_10] : memref<8x32xf32, #tpu.memory_space<vmem>>, vector<8x32xf32>
    %cst_11 = arith.constant dense<0.000000e+00> : vector<8x128xf32>
    %9 = tpu.matmul %7, %6, %cst_11 {dimension_numbers = #tpu.dot_dimension_numbers<[1], [0], [0], [1], [0, 0, 1, 1], [], []>} : vector<8x32xf32>, vector<32x128xf32>, vector<8x128xf32> -> vector<8x128xf32>
    %10 = vector.extract_strided_slice %5 {offsets = [0, 0], sizes = [8, 128], strides = [1, 1]} : vector<64x128xf32> to vector<8x128xf32>
    %11 = arith.addf %9, %10 : vector<8x128xf32>
    %12 = arith.negf %11 : vector<8x128xf32>
    %13 = math.exp %12 : vector<8x128xf32>
    %cst_12 = arith.constant 1.000000e+00 : f32
    %14 = vector.broadcast %cst_12 : f32 to vector<8x128xf32>
    %15 = arith.addf %14, %13 : vector<8x128xf32>
    %16 = arith.divf %14, %15 : vector<8x128xf32>
    %17 = vector.extract_strided_slice %16 {offsets = [0, 0], sizes = [8, 32], strides = [1, 1]} : vector<8x128xf32> to vector<8x32xf32>
    %18 = vector.extract_strided_slice %16 {offsets = [0, 32], sizes = [8, 32], strides = [1, 1]} : vector<8x128xf32> to vector<8x32xf32>
    %19 = vector.extract_strided_slice %16 {offsets = [0, 64], sizes = [8, 32], strides = [1, 1]} : vector<8x128xf32> to vector<8x32xf32>
    %cst_13 = arith.constant 2.000000e+00 : f32
    %20 = vector.broadcast %cst_13 : f32 to vector<8x32xf32>
    %21 = arith.mulf %20, %19 : vector<8x32xf32>
    %cst_14 = arith.constant 1.000000e+00 : f32
    %22 = vector.broadcast %cst_14 : f32 to vector<8x32xf32>
    %23 = arith.subf %21, %22 : vector<8x32xf32>
    %24 = vector.extract_strided_slice %16 {offsets = [0, 96], sizes = [8, 32], strides = [1, 1]} : vector<8x128xf32> to vector<8x32xf32>
    %25 = arith.mulf %18, %8 : vector<8x32xf32>
    %26 = arith.mulf %17, %23 : vector<8x32xf32>
    %27 = arith.addf %25, %26 : vector<8x32xf32>
    %cst_15 = arith.constant 2.000000e+00 : f32
    %28 = vector.broadcast %cst_15 : f32 to vector<8x32xf32>
    %29 = arith.mulf %28, %27 : vector<8x32xf32>
    %30 = arith.negf %29 : vector<8x32xf32>
    %31 = math.exp %30 : vector<8x32xf32>
    %cst_16 = arith.constant 1.000000e+00 : f32
    %32 = vector.broadcast %cst_16 : f32 to vector<8x32xf32>
    %33 = arith.addf %32, %31 : vector<8x32xf32>
    %34 = arith.divf %32, %33 : vector<8x32xf32>
    %cst_17 = arith.constant 2.000000e+00 : f32
    %35 = vector.broadcast %cst_17 : f32 to vector<8x32xf32>
    %36 = arith.mulf %35, %34 : vector<8x32xf32>
    %cst_18 = arith.constant 1.000000e+00 : f32
    %37 = vector.broadcast %cst_18 : f32 to vector<8x32xf32>
    %38 = arith.subf %36, %37 : vector<8x32xf32>
    %39 = arith.mulf %24, %38 : vector<8x32xf32>
    %c0_19 = arith.constant 0 : index
    %c0_20 = arith.constant 0 : index
    %c0_21 = arith.constant 0 : index
    %40 = vector.load %arg10[%c0_19, %c0_20, %c0_21] : memref<8x8x32xf32, #tpu.memory_space<vmem>>, vector<1x8x32xf32>
    %41 = vector.shape_cast %40 : vector<1x8x32xf32> to vector<8x32xf32>
    %42 = vector.shape_cast %39 : vector<8x32xf32> to vector<1x8x32xf32>
    tpu.vector_store %arg10[%c0_19, %c0_20, %c0_21], %42 {strides = array<i32>} : memref<8x8x32xf32, #tpu.memory_space<vmem>>, vector<1x8x32xf32>,
    %c7 = arith.constant 7 : index
    %c0_22 = arith.constant 0 : index
    %c0_23 = arith.constant 0 : index
    %43 = vector.load %arg11[%c7, %c0_22, %c0_23] : memref<8x8x32xf32, #tpu.memory_space<vmem>>, vector<1x8x32xf32>
    %44 = vector.shape_cast %43 : vector<1x8x32xf32> to vector<8x32xf32>
    %45 = vector.shape_cast %39 : vector<8x32xf32> to vector<1x8x32xf32>
    tpu.vector_store %arg11[%c7, %c0_22, %c0_23], %45 {strides = array<i32>} : memref<8x8x32xf32, #tpu.memory_space<vmem>>, vector<1x8x32xf32>,
    %cst_24 = arith.constant dense<0.000000e+00> : vector<8x128xf32>
    %46 = tpu.matmul %39, %6, %cst_24 {dimension_numbers = #tpu.dot_dimension_numbers<[1], [0], [0], [1], [0, 0, 1, 1], [], []>} : vector<8x32xf32>, vector<32x128xf32>, vector<8x128xf32> -> vector<8x128xf32>
    %47 = vector.extract_strided_slice %5 {offsets = [8, 0], sizes = [8, 128], strides = [1, 1]} : vector<64x128xf32> to vector<8x128xf32>
    %48 = arith.addf %46, %47 : vector<8x128xf32>
    %49 = arith.negf %48 : vector<8x128xf32>
    %50 = math.exp %49 : vector<8x128xf32>
    %cst_25 = arith.constant 1.000000e+00 : f32
    %51 = vector.broadcast %cst_25 : f32 to vector<8x128xf32>
    %52 = arith.addf %51, %50 : vector<8x128xf32>
    %53 = arith.divf %51, %52 : vector<8x128xf32>
    %54 = vector.extract_strided_slice %53 {offsets = [0, 0], sizes = [8, 32], strides = [1, 1]} : vector<8x128xf32> to vector<8x32xf32>
    %55 = vector.extract_strided_slice %53 {offsets = [0, 32], sizes = [8, 32], strides = [1, 1]} : vector<8x128xf32> to vector<8x32xf32>
    %56 = vector.extract_strided_slice %53 {offsets = [0, 64], sizes = [8, 32], strides = [1, 1]} : vector<8x128xf32> to vector<8x32xf32>
    %cst_26 = arith.constant 2.000000e+00 : f32
    %57 = vector.broadcast %cst_26 : f32 to vector<8x32xf32>
    %58 = arith.mulf %57, %56 : vector<8x32xf32>
    %cst_27 = arith.constant 1.000000e+00 : f32
    %59 = vector.broadcast %cst_27 : f32 to vector<8x32xf32>
    %60 = arith.subf %58, %59 : vector<8x32xf32>
    %61 = vector.extract_strided_slice %53 {offsets = [0, 96], sizes = [8, 32], strides = [1, 1]} : vector<8x128xf32> to vector<8x32xf32>
    %62 = arith.mulf %55, %27 : vector<8x32xf32>
    %63 = arith.mulf %54, %60 : vector<8x32xf32>
    %64 = arith.addf %62, %63 : vector<8x32xf32>
    %cst_28 = arith.constant 2.000000e+00 : f32
    %65 = vector.broadcast %cst_28 : f32 to vector<8x32xf32>
    %66 = arith.mulf %65, %64 : vector<8x32xf32>
    %67 = arith.negf %66 : vector<8x32xf32>
    %68 = math.exp %67 : vector<8x32xf32>
    %cst_29 = arith.constant 1.000000e+00 : f32
    %69 = vector.broadcast %cst_29 : f32 to vector<8x32xf32>
    %70 = arith.addf %69, %68 : vector<8x32xf32>
    %71 = arith.divf %69, %70 : vector<8x32xf32>
    %cst_30 = arith.constant 2.000000e+00 : f32
    %72 = vector.broadcast %cst_30 : f32 to vector<8x32xf32>
    %73 = arith.mulf %72, %71 : vector<8x32xf32>
    %cst_31 = arith.constant 1.000000e+00 : f32
    %74 = vector.broadcast %cst_31 : f32 to vector<8x32xf32>
    %75 = arith.subf %73, %74 : vector<8x32xf32>
    %76 = arith.mulf %61, %75 : vector<8x32xf32>
    %c1 = arith.constant 1 : index
    %c0_32 = arith.constant 0 : index
    %c0_33 = arith.constant 0 : index
    %77 = vector.load %arg10[%c1, %c0_32, %c0_33] : memref<8x8x32xf32, #tpu.memory_space<vmem>>, vector<1x8x32xf32>
    %78 = vector.shape_cast %77 : vector<1x8x32xf32> to vector<8x32xf32>
    %79 = vector.shape_cast %76 : vector<8x32xf32> to vector<1x8x32xf32>
    tpu.vector_store %arg10[%c1, %c0_32, %c0_33], %79 {strides = array<i32>} : memref<8x8x32xf32, #tpu.memory_space<vmem>>, vector<1x8x32xf32>,
    %c6 = arith.constant 6 : index
    %c0_34 = arith.constant 0 : index
    %c0_35 = arith.constant 0 : index
    %80 = vector.load %arg11[%c6, %c0_34, %c0_35] : memref<8x8x32xf32, #tpu.memory_space<vmem>>, vector<1x8x32xf32>
    %81 = vector.shape_cast %80 : vector<1x8x32xf32> to vector<8x32xf32>
    %82 = vector.shape_cast %76 : vector<8x32xf32> to vector<1x8x32xf32>
    tpu.vector_store %arg11[%c6, %c0_34, %c0_35], %82 {strides = array<i32>} : memref<8x8x32xf32, #tpu.memory_space<vmem>>, vector<1x8x32xf32>,
    %cst_36 = arith.constant dense<0.000000e+00> : vector<8x128xf32>
    %83 = tpu.matmul %76, %6, %cst_36 {dimension_numbers = #tpu.dot_dimension_numbers<[1], [0], [0], [1], [0, 0, 1, 1], [], []>} : vector<8x32xf32>, vector<32x128xf32>, vector<8x128xf32> -> vector<8x128xf32>
    %84 = vector.extract_strided_slice %5 {offsets = [16, 0], sizes = [8, 128], strides = [1, 1]} : vector<64x128xf32> to vector<8x128xf32>
    %85 = arith.addf %83, %84 : vector<8x128xf32>
    %86 = arith.negf %85 : vector<8x128xf32>
    %87 = math.exp %86 : vector<8x128xf32>
    %cst_37 = arith.constant 1.000000e+00 : f32
    %88 = vector.broadcast %cst_37 : f32 to vector<8x128xf32>
    %89 = arith.addf %88, %87 : vector<8x128xf32>
    %90 = arith.divf %88, %89 : vector<8x128xf32>
    %91 = vector.extract_strided_slice %90 {offsets = [0, 0], sizes = [8, 32], strides = [1, 1]} : vector<8x128xf32> to vector<8x32xf32>
    %92 = vector.extract_strided_slice %90 {offsets = [0, 32], sizes = [8, 32], strides = [1, 1]} : vector<8x128xf32> to vector<8x32xf32>
    %93 = vector.extract_strided_slice %90 {offsets = [0, 64], sizes = [8, 32], strides = [1, 1]} : vector<8x128xf32> to vector<8x32xf32>
    %cst_38 = arith.constant 2.000000e+00 : f32
    %94 = vector.broadcast %cst_38 : f32 to vector<8x32xf32>
    %95 = arith.mulf %94, %93 : vector<8x32xf32>
    %cst_39 = arith.constant 1.000000e+00 : f32
    %96 = vector.broadcast %cst_39 : f32 to vector<8x32xf32>
    %97 = arith.subf %95, %96 : vector<8x32xf32>
    %98 = vector.extract_strided_slice %90 {offsets = [0, 96], sizes = [8, 32], strides = [1, 1]} : vector<8x128xf32> to vector<8x32xf32>
    %99 = arith.mulf %92, %64 : vector<8x32xf32>
    %100 = arith.mulf %91, %97 : vector<8x32xf32>
    %101 = arith.addf %99, %100 : vector<8x32xf32>
    %cst_40 = arith.constant 2.000000e+00 : f32
    %102 = vector.broadcast %cst_40 : f32 to vector<8x32xf32>
    %103 = arith.mulf %102, %101 : vector<8x32xf32>
    %104 = arith.negf %103 : vector<8x32xf32>
    %105 = math.exp %104 : vector<8x32xf32>
    %cst_41 = arith.constant 1.000000e+00 : f32
    %106 = vector.broadcast %cst_41 : f32 to vector<8x32xf32>
    %107 = arith.addf %106, %105 : vector<8x32xf32>
    %108 = arith.divf %106, %107 : vector<8x32xf32>
    %cst_42 = arith.constant 2.000000e+00 : f32
    %109 = vector.broadcast %cst_42 : f32 to vector<8x32xf32>
    %110 = arith.mulf %109, %108 : vector<8x32xf32>
    %cst_43 = arith.constant 1.000000e+00 : f32
    %111 = vector.broadcast %cst_43 : f32 to vector<8x32xf32>
    %112 = arith.subf %110, %111 : vector<8x32xf32>
    %113 = arith.mulf %98, %112 : vector<8x32xf32>
    %c2 = arith.constant 2 : index
    %c0_44 = arith.constant 0 : index
    %c0_45 = arith.constant 0 : index
    %114 = vector.load %arg10[%c2, %c0_44, %c0_45] : memref<8x8x32xf32, #tpu.memory_space<vmem>>, vector<1x8x32xf32>
    %115 = vector.shape_cast %114 : vector<1x8x32xf32> to vector<8x32xf32>
    %116 = vector.shape_cast %113 : vector<8x32xf32> to vector<1x8x32xf32>
    tpu.vector_store %arg10[%c2, %c0_44, %c0_45], %116 {strides = array<i32>} : memref<8x8x32xf32, #tpu.memory_space<vmem>>, vector<1x8x32xf32>,
    %c5 = arith.constant 5 : index
    %c0_46 = arith.constant 0 : index
    %c0_47 = arith.constant 0 : index
    %117 = vector.load %arg11[%c5, %c0_46, %c0_47] : memref<8x8x32xf32, #tpu.memory_space<vmem>>, vector<1x8x32xf32>
    %118 = vector.shape_cast %117 : vector<1x8x32xf32> to vector<8x32xf32>
    %119 = vector.shape_cast %113 : vector<8x32xf32> to vector<1x8x32xf32>
    tpu.vector_store %arg11[%c5, %c0_46, %c0_47], %119 {strides = array<i32>} : memref<8x8x32xf32, #tpu.memory_space<vmem>>, vector<1x8x32xf32>,
    %cst_48 = arith.constant dense<0.000000e+00> : vector<8x128xf32>
    %120 = tpu.matmul %113, %6, %cst_48 {dimension_numbers = #tpu.dot_dimension_numbers<[1], [0], [0], [1], [0, 0, 1, 1], [], []>} : vector<8x32xf32>, vector<32x128xf32>, vector<8x128xf32> -> vector<8x128xf32>
    %121 = vector.extract_strided_slice %5 {offsets = [24, 0], sizes = [8, 128], strides = [1, 1]} : vector<64x128xf32> to vector<8x128xf32>
    %122 = arith.addf %120, %121 : vector<8x128xf32>
    %123 = arith.negf %122 : vector<8x128xf32>
    %124 = math.exp %123 : vector<8x128xf32>
    %cst_49 = arith.constant 1.000000e+00 : f32
    %125 = vector.broadcast %cst_49 : f32 to vector<8x128xf32>
    %126 = arith.addf %125, %124 : vector<8x128xf32>
    %127 = arith.divf %125, %126 : vector<8x128xf32>
    %128 = vector.extract_strided_slice %127 {offsets = [0, 0], sizes = [8, 32], strides = [1, 1]} : vector<8x128xf32> to vector<8x32xf32>
    %129 = vector.extract_strided_slice %127 {offsets = [0, 32], sizes = [8, 32], strides = [1, 1]} : vector<8x128xf32> to vector<8x32xf32>
    %130 = vector.extract_strided_slice %127 {offsets = [0, 64], sizes = [8, 32], strides = [1, 1]} : vector<8x128xf32> to vector<8x32xf32>
    %cst_50 = arith.constant 2.000000e+00 : f32
    %131 = vector.broadcast %cst_50 : f32 to vector<8x32xf32>
    %132 = arith.mulf %131, %130 : vector<8x32xf32>
    %cst_51 = arith.constant 1.000000e+00 : f32
    %133 = vector.broadcast %cst_51 : f32 to vector<8x32xf32>
    %134 = arith.subf %132, %133 : vector<8x32xf32>
    %135 = vector.extract_strided_slice %127 {offsets = [0, 96], sizes = [8, 32], strides = [1, 1]} : vector<8x128xf32> to vector<8x32xf32>
    %136 = arith.mulf %129, %101 : vector<8x32xf32>
    %137 = arith.mulf %128, %134 : vector<8x32xf32>
    %138 = arith.addf %136, %137 : vector<8x32xf32>
    %cst_52 = arith.constant 2.000000e+00 : f32
    %139 = vector.broadcast %cst_52 : f32 to vector<8x32xf32>
    %140 = arith.mulf %139, %138 : vector<8x32xf32>
    %141 = arith.negf %140 : vector<8x32xf32>
    %142 = math.exp %141 : vector<8x32xf32>
    %cst_53 = arith.constant 1.000000e+00 : f32
    %143 = vector.broadcast %cst_53 : f32 to vector<8x32xf32>
    %144 = arith.addf %143, %142 : vector<8x32xf32>
    %145 = arith.divf %143, %144 : vector<8x32xf32>
    %cst_54 = arith.constant 2.000000e+00 : f32
    %146 = vector.broadcast %cst_54 : f32 to vector<8x32xf32>
    %147 = arith.mulf %146, %145 : vector<8x32xf32>
    %cst_55 = arith.constant 1.000000e+00 : f32
    %148 = vector.broadcast %cst_55 : f32 to vector<8x32xf32>
    %149 = arith.subf %147, %148 : vector<8x32xf32>
    %150 = arith.mulf %135, %149 : vector<8x32xf32>
    %c3 = arith.constant 3 : index
    %c0_56 = arith.constant 0 : index
    %c0_57 = arith.constant 0 : index
    %151 = vector.load %arg10[%c3, %c0_56, %c0_57] : memref<8x8x32xf32, #tpu.memory_space<vmem>>, vector<1x8x32xf32>
    %152 = vector.shape_cast %151 : vector<1x8x32xf32> to vector<8x32xf32>
    %153 = vector.shape_cast %150 : vector<8x32xf32> to vector<1x8x32xf32>
    tpu.vector_store %arg10[%c3, %c0_56, %c0_57], %153 {strides = array<i32>} : memref<8x8x32xf32, #tpu.memory_space<vmem>>, vector<1x8x32xf32>,
    %c4 = arith.constant 4 : index
    %c0_58 = arith.constant 0 : index
    %c0_59 = arith.constant 0 : index
    %154 = vector.load %arg11[%c4, %c0_58, %c0_59] : memref<8x8x32xf32, #tpu.memory_space<vmem>>, vector<1x8x32xf32>
    %155 = vector.shape_cast %154 : vector<1x8x32xf32> to vector<8x32xf32>
    %156 = vector.shape_cast %150 : vector<8x32xf32> to vector<1x8x32xf32>
    tpu.vector_store %arg11[%c4, %c0_58, %c0_59], %156 {strides = array<i32>} : memref<8x8x32xf32, #tpu.memory_space<vmem>>, vector<1x8x32xf32>,
    %cst_60 = arith.constant dense<0.000000e+00> : vector<8x128xf32>
    %157 = tpu.matmul %150, %6, %cst_60 {dimension_numbers = #tpu.dot_dimension_numbers<[1], [0], [0], [1], [0, 0, 1, 1], [], []>} : vector<8x32xf32>, vector<32x128xf32>, vector<8x128xf32> -> vector<8x128xf32>
    %158 = vector.extract_strided_slice %5 {offsets = [32, 0], sizes = [8, 128], strides = [1, 1]} : vector<64x128xf32> to vector<8x128xf32>
    %159 = arith.addf %157, %158 : vector<8x128xf32>
    %160 = arith.negf %159 : vector<8x128xf32>
    %161 = math.exp %160 : vector<8x128xf32>
    %cst_61 = arith.constant 1.000000e+00 : f32
    %162 = vector.broadcast %cst_61 : f32 to vector<8x128xf32>
    %163 = arith.addf %162, %161 : vector<8x128xf32>
    %164 = arith.divf %162, %163 : vector<8x128xf32>
    %165 = vector.extract_strided_slice %164 {offsets = [0, 0], sizes = [8, 32], strides = [1, 1]} : vector<8x128xf32> to vector<8x32xf32>
    %166 = vector.extract_strided_slice %164 {offsets = [0, 32], sizes = [8, 32], strides = [1, 1]} : vector<8x128xf32> to vector<8x32xf32>
    %167 = vector.extract_strided_slice %164 {offsets = [0, 64], sizes = [8, 32], strides = [1, 1]} : vector<8x128xf32> to vector<8x32xf32>
    %cst_62 = arith.constant 2.000000e+00 : f32
    %168 = vector.broadcast %cst_62 : f32 to vector<8x32xf32>
    %169 = arith.mulf %168, %167 : vector<8x32xf32>
    %cst_63 = arith.constant 1.000000e+00 : f32
    %170 = vector.broadcast %cst_63 : f32 to vector<8x32xf32>
    %171 = arith.subf %169, %170 : vector<8x32xf32>
    %172 = vector.extract_strided_slice %164 {offsets = [0, 96], sizes = [8, 32], strides = [1, 1]} : vector<8x128xf32> to vector<8x32xf32>
    %173 = arith.mulf %166, %138 : vector<8x32xf32>
    %174 = arith.mulf %165, %171 : vector<8x32xf32>
    %175 = arith.addf %173, %174 : vector<8x32xf32>
    %cst_64 = arith.constant 2.000000e+00 : f32
    %176 = vector.broadcast %cst_64 : f32 to vector<8x32xf32>
    %177 = arith.mulf %176, %175 : vector<8x32xf32>
    %178 = arith.negf %177 : vector<8x32xf32>
    %179 = math.exp %178 : vector<8x32xf32>
    %cst_65 = arith.constant 1.000000e+00 : f32
    %180 = vector.broadcast %cst_65 : f32 to vector<8x32xf32>
    %181 = arith.addf %180, %179 : vector<8x32xf32>
    %182 = arith.divf %180, %181 : vector<8x32xf32>
    %cst_66 = arith.constant 2.000000e+00 : f32
    %183 = vector.broadcast %cst_66 : f32 to vector<8x32xf32>
    %184 = arith.mulf %183, %182 : vector<8x32xf32>
    %cst_67 = arith.constant 1.000000e+00 : f32
    %185 = vector.broadcast %cst_67 : f32 to vector<8x32xf32>
    %186 = arith.subf %184, %185 : vector<8x32xf32>
    %187 = arith.mulf %172, %186 : vector<8x32xf32>
    %c4_68 = arith.constant 4 : index
    %c0_69 = arith.constant 0 : index
    %c0_70 = arith.constant 0 : index
    %188 = vector.load %arg10[%c4_68, %c0_69, %c0_70] : memref<8x8x32xf32, #tpu.memory_space<vmem>>, vector<1x8x32xf32>
    %189 = vector.shape_cast %188 : vector<1x8x32xf32> to vector<8x32xf32>
    %190 = vector.shape_cast %187 : vector<8x32xf32> to vector<1x8x32xf32>
    tpu.vector_store %arg10[%c4_68, %c0_69, %c0_70], %190 {strides = array<i32>} : memref<8x8x32xf32, #tpu.memory_space<vmem>>, vector<1x8x32xf32>,
    %c3_71 = arith.constant 3 : index
    %c0_72 = arith.constant 0 : index
    %c0_73 = arith.constant 0 : index
    %191 = vector.load %arg11[%c3_71, %c0_72, %c0_73] : memref<8x8x32xf32, #tpu.memory_space<vmem>>, vector<1x8x32xf32>
    %192 = vector.shape_cast %191 : vector<1x8x32xf32> to vector<8x32xf32>
    %193 = vector.shape_cast %187 : vector<8x32xf32> to vector<1x8x32xf32>
    tpu.vector_store %arg11[%c3_71, %c0_72, %c0_73], %193 {strides = array<i32>} : memref<8x8x32xf32, #tpu.memory_space<vmem>>, vector<1x8x32xf32>,
    %cst_74 = arith.constant dense<0.000000e+00> : vector<8x128xf32>
    %194 = tpu.matmul %187, %6, %cst_74 {dimension_numbers = #tpu.dot_dimension_numbers<[1], [0], [0], [1], [0, 0, 1, 1], [], []>} : vector<8x32xf32>, vector<32x128xf32>, vector<8x128xf32> -> vector<8x128xf32>
    %195 = vector.extract_strided_slice %5 {offsets = [40, 0], sizes = [8, 128], strides = [1, 1]} : vector<64x128xf32> to vector<8x128xf32>
    %196 = arith.addf %194, %195 : vector<8x128xf32>
    %197 = arith.negf %196 : vector<8x128xf32>
    %198 = math.exp %197 : vector<8x128xf32>
    %cst_75 = arith.constant 1.000000e+00 : f32
    %199 = vector.broadcast %cst_75 : f32 to vector<8x128xf32>
    %200 = arith.addf %199, %198 : vector<8x128xf32>
    %201 = arith.divf %199, %200 : vector<8x128xf32>
    %202 = vector.extract_strided_slice %201 {offsets = [0, 0], sizes = [8, 32], strides = [1, 1]} : vector<8x128xf32> to vector<8x32xf32>
    %203 = vector.extract_strided_slice %201 {offsets = [0, 32], sizes = [8, 32], strides = [1, 1]} : vector<8x128xf32> to vector<8x32xf32>
    %204 = vector.extract_strided_slice %201 {offsets = [0, 64], sizes = [8, 32], strides = [1, 1]} : vector<8x128xf32> to vector<8x32xf32>
    %cst_76 = arith.constant 2.000000e+00 : f32
    %205 = vector.broadcast %cst_76 : f32 to vector<8x32xf32>
    %206 = arith.mulf %205, %204 : vector<8x32xf32>
    %cst_77 = arith.constant 1.000000e+00 : f32
    %207 = vector.broadcast %cst_77 : f32 to vector<8x32xf32>
    %208 = arith.subf %206, %207 : vector<8x32xf32>
    %209 = vector.extract_strided_slice %201 {offsets = [0, 96], sizes = [8, 32], strides = [1, 1]} : vector<8x128xf32> to vector<8x32xf32>
    %210 = arith.mulf %203, %175 : vector<8x32xf32>
    %211 = arith.mulf %202, %208 : vector<8x32xf32>
    %212 = arith.addf %210, %211 : vector<8x32xf32>
    %cst_78 = arith.constant 2.000000e+00 : f32
    %213 = vector.broadcast %cst_78 : f32 to vector<8x32xf32>
    %214 = arith.mulf %213, %212 : vector<8x32xf32>
    %215 = arith.negf %214 : vector<8x32xf32>
    %216 = math.exp %215 : vector<8x32xf32>
    %cst_79 = arith.constant 1.000000e+00 : f32
    %217 = vector.broadcast %cst_79 : f32 to vector<8x32xf32>
    %218 = arith.addf %217, %216 : vector<8x32xf32>
    %219 = arith.divf %217, %218 : vector<8x32xf32>
    %cst_80 = arith.constant 2.000000e+00 : f32
    %220 = vector.broadcast %cst_80 : f32 to vector<8x32xf32>
    %221 = arith.mulf %220, %219 : vector<8x32xf32>
    %cst_81 = arith.constant 1.000000e+00 : f32
    %222 = vector.broadcast %cst_81 : f32 to vector<8x32xf32>
    %223 = arith.subf %221, %222 : vector<8x32xf32>
    %224 = arith.mulf %209, %223 : vector<8x32xf32>
    %c5_82 = arith.constant 5 : index
    %c0_83 = arith.constant 0 : index
    %c0_84 = arith.constant 0 : index
    %225 = vector.load %arg10[%c5_82, %c0_83, %c0_84] : memref<8x8x32xf32, #tpu.memory_space<vmem>>, vector<1x8x32xf32>
    %226 = vector.shape_cast %225 : vector<1x8x32xf32> to vector<8x32xf32>
    %227 = vector.shape_cast %224 : vector<8x32xf32> to vector<1x8x32xf32>
    tpu.vector_store %arg10[%c5_82, %c0_83, %c0_84], %227 {strides = array<i32>} : memref<8x8x32xf32, #tpu.memory_space<vmem>>, vector<1x8x32xf32>,
    %c2_85 = arith.constant 2 : index
    %c0_86 = arith.constant 0 : index
    %c0_87 = arith.constant 0 : index
    %228 = vector.load %arg11[%c2_85, %c0_86, %c0_87] : memref<8x8x32xf32, #tpu.memory_space<vmem>>, vector<1x8x32xf32>
    %229 = vector.shape_cast %228 : vector<1x8x32xf32> to vector<8x32xf32>
    %230 = vector.shape_cast %224 : vector<8x32xf32> to vector<1x8x32xf32>
    tpu.vector_store %arg11[%c2_85, %c0_86, %c0_87], %230 {strides = array<i32>} : memref<8x8x32xf32, #tpu.memory_space<vmem>>, vector<1x8x32xf32>,
    %cst_88 = arith.constant dense<0.000000e+00> : vector<8x128xf32>
    %231 = tpu.matmul %224, %6, %cst_88 {dimension_numbers = #tpu.dot_dimension_numbers<[1], [0], [0], [1], [0, 0, 1, 1], [], []>} : vector<8x32xf32>, vector<32x128xf32>, vector<8x128xf32> -> vector<8x128xf32>
    %232 = vector.extract_strided_slice %5 {offsets = [48, 0], sizes = [8, 128], strides = [1, 1]} : vector<64x128xf32> to vector<8x128xf32>
    %233 = arith.addf %231, %232 : vector<8x128xf32>
    %234 = arith.negf %233 : vector<8x128xf32>
    %235 = math.exp %234 : vector<8x128xf32>
    %cst_89 = arith.constant 1.000000e+00 : f32
    %236 = vector.broadcast %cst_89 : f32 to vector<8x128xf32>
    %237 = arith.addf %236, %235 : vector<8x128xf32>
    %238 = arith.divf %236, %237 : vector<8x128xf32>
    %239 = vector.extract_strided_slice %238 {offsets = [0, 0], sizes = [8, 32], strides = [1, 1]} : vector<8x128xf32> to vector<8x32xf32>
    %240 = vector.extract_strided_slice %238 {offsets = [0, 32], sizes = [8, 32], strides = [1, 1]} : vector<8x128xf32> to vector<8x32xf32>
    %241 = vector.extract_strided_slice %238 {offsets = [0, 64], sizes = [8, 32], strides = [1, 1]} : vector<8x128xf32> to vector<8x32xf32>
    %cst_90 = arith.constant 2.000000e+00 : f32
    %242 = vector.broadcast %cst_90 : f32 to vector<8x32xf32>
    %243 = arith.mulf %242, %241 : vector<8x32xf32>
    %cst_91 = arith.constant 1.000000e+00 : f32
    %244 = vector.broadcast %cst_91 : f32 to vector<8x32xf32>
    %245 = arith.subf %243, %244 : vector<8x32xf32>
    %246 = vector.extract_strided_slice %238 {offsets = [0, 96], sizes = [8, 32], strides = [1, 1]} : vector<8x128xf32> to vector<8x32xf32>
    %247 = arith.mulf %240, %212 : vector<8x32xf32>
    %248 = arith.mulf %239, %245 : vector<8x32xf32>
    %249 = arith.addf %247, %248 : vector<8x32xf32>
    %cst_92 = arith.constant 2.000000e+00 : f32
    %250 = vector.broadcast %cst_92 : f32 to vector<8x32xf32>
    %251 = arith.mulf %250, %249 : vector<8x32xf32>
    %252 = arith.negf %251 : vector<8x32xf32>
    %253 = math.exp %252 : vector<8x32xf32>
    %cst_93 = arith.constant 1.000000e+00 : f32
    %254 = vector.broadcast %cst_93 : f32 to vector<8x32xf32>
    %255 = arith.addf %254, %253 : vector<8x32xf32>
    %256 = arith.divf %254, %255 : vector<8x32xf32>
    %cst_94 = arith.constant 2.000000e+00 : f32
    %257 = vector.broadcast %cst_94 : f32 to vector<8x32xf32>
    %258 = arith.mulf %257, %256 : vector<8x32xf32>
    %cst_95 = arith.constant 1.000000e+00 : f32
    %259 = vector.broadcast %cst_95 : f32 to vector<8x32xf32>
    %260 = arith.subf %258, %259 : vector<8x32xf32>
    %261 = arith.mulf %246, %260 : vector<8x32xf32>
    %c6_96 = arith.constant 6 : index
    %c0_97 = arith.constant 0 : index
    %c0_98 = arith.constant 0 : index
    %262 = vector.load %arg10[%c6_96, %c0_97, %c0_98] : memref<8x8x32xf32, #tpu.memory_space<vmem>>, vector<1x8x32xf32>
    %263 = vector.shape_cast %262 : vector<1x8x32xf32> to vector<8x32xf32>
    %264 = vector.shape_cast %261 : vector<8x32xf32> to vector<1x8x32xf32>
    tpu.vector_store %arg10[%c6_96, %c0_97, %c0_98], %264 {strides = array<i32>} : memref<8x8x32xf32, #tpu.memory_space<vmem>>, vector<1x8x32xf32>,
    %c1_99 = arith.constant 1 : index
    %c0_100 = arith.constant 0 : index
    %c0_101 = arith.constant 0 : index
    %265 = vector.load %arg11[%c1_99, %c0_100, %c0_101] : memref<8x8x32xf32, #tpu.memory_space<vmem>>, vector<1x8x32xf32>
    %266 = vector.shape_cast %265 : vector<1x8x32xf32> to vector<8x32xf32>
    %267 = vector.shape_cast %261 : vector<8x32xf32> to vector<1x8x32xf32>
    tpu.vector_store %arg11[%c1_99, %c0_100, %c0_101], %267 {strides = array<i32>} : memref<8x8x32xf32, #tpu.memory_space<vmem>>, vector<1x8x32xf32>,
    %cst_102 = arith.constant dense<0.000000e+00> : vector<8x128xf32>
    %268 = tpu.matmul %261, %6, %cst_102 {dimension_numbers = #tpu.dot_dimension_numbers<[1], [0], [0], [1], [0, 0, 1, 1], [], []>} : vector<8x32xf32>, vector<32x128xf32>, vector<8x128xf32> -> vector<8x128xf32>
    %269 = vector.extract_strided_slice %5 {offsets = [56, 0], sizes = [8, 128], strides = [1, 1]} : vector<64x128xf32> to vector<8x128xf32>
    %270 = arith.addf %268, %269 : vector<8x128xf32>
    %271 = arith.negf %270 : vector<8x128xf32>
    %272 = math.exp %271 : vector<8x128xf32>
    %cst_103 = arith.constant 1.000000e+00 : f32
    %273 = vector.broadcast %cst_103 : f32 to vector<8x128xf32>
    %274 = arith.addf %273, %272 : vector<8x128xf32>
    %275 = arith.divf %273, %274 : vector<8x128xf32>
    %276 = vector.extract_strided_slice %275 {offsets = [0, 0], sizes = [8, 32], strides = [1, 1]} : vector<8x128xf32> to vector<8x32xf32>
    %277 = vector.extract_strided_slice %275 {offsets = [0, 32], sizes = [8, 32], strides = [1, 1]} : vector<8x128xf32> to vector<8x32xf32>
    %278 = vector.extract_strided_slice %275 {offsets = [0, 64], sizes = [8, 32], strides = [1, 1]} : vector<8x128xf32> to vector<8x32xf32>
    %cst_104 = arith.constant 2.000000e+00 : f32
    %279 = vector.broadcast %cst_104 : f32 to vector<8x32xf32>
    %280 = arith.mulf %279, %278 : vector<8x32xf32>
    %cst_105 = arith.constant 1.000000e+00 : f32
    %281 = vector.broadcast %cst_105 : f32 to vector<8x32xf32>
    %282 = arith.subf %280, %281 : vector<8x32xf32>
    %283 = vector.extract_strided_slice %275 {offsets = [0, 96], sizes = [8, 32], strides = [1, 1]} : vector<8x128xf32> to vector<8x32xf32>
    %284 = arith.mulf %277, %249 : vector<8x32xf32>
    %285 = arith.mulf %276, %282 : vector<8x32xf32>
    %286 = arith.addf %284, %285 : vector<8x32xf32>
    %cst_106 = arith.constant 2.000000e+00 : f32
    %287 = vector.broadcast %cst_106 : f32 to vector<8x32xf32>
    %288 = arith.mulf %287, %286 : vector<8x32xf32>
    %289 = arith.negf %288 : vector<8x32xf32>
    %290 = math.exp %289 : vector<8x32xf32>
    %cst_107 = arith.constant 1.000000e+00 : f32
    %291 = vector.broadcast %cst_107 : f32 to vector<8x32xf32>
    %292 = arith.addf %291, %290 : vector<8x32xf32>
    %293 = arith.divf %291, %292 : vector<8x32xf32>
    %cst_108 = arith.constant 2.000000e+00 : f32
    %294 = vector.broadcast %cst_108 : f32 to vector<8x32xf32>
    %295 = arith.mulf %294, %293 : vector<8x32xf32>
    %cst_109 = arith.constant 1.000000e+00 : f32
    %296 = vector.broadcast %cst_109 : f32 to vector<8x32xf32>
    %297 = arith.subf %295, %296 : vector<8x32xf32>
    %298 = arith.mulf %283, %297 : vector<8x32xf32>
    %c7_110 = arith.constant 7 : index
    %c0_111 = arith.constant 0 : index
    %c0_112 = arith.constant 0 : index
    %299 = vector.load %arg10[%c7_110, %c0_111, %c0_112] : memref<8x8x32xf32, #tpu.memory_space<vmem>>, vector<1x8x32xf32>
    %300 = vector.shape_cast %299 : vector<1x8x32xf32> to vector<8x32xf32>
    %301 = vector.shape_cast %298 : vector<8x32xf32> to vector<1x8x32xf32>
    tpu.vector_store %arg10[%c7_110, %c0_111, %c0_112], %301 {strides = array<i32>} : memref<8x8x32xf32, #tpu.memory_space<vmem>>, vector<1x8x32xf32>,
    %c0_113 = arith.constant 0 : index
    %c0_114 = arith.constant 0 : index
    %c0_115 = arith.constant 0 : index
    %302 = vector.load %arg11[%c0_113, %c0_114, %c0_115] : memref<8x8x32xf32, #tpu.memory_space<vmem>>, vector<1x8x32xf32>
    %303 = vector.shape_cast %302 : vector<1x8x32xf32> to vector<8x32xf32>
    %304 = vector.shape_cast %298 : vector<8x32xf32> to vector<1x8x32xf32>
    tpu.vector_store %arg11[%c0_113, %c0_114, %c0_115], %304 {strides = array<i32>} : memref<8x8x32xf32, #tpu.memory_space<vmem>>, vector<1x8x32xf32>,
    %c0_116 = arith.constant 0 : index
    %c0_117 = arith.constant 0 : index
    %c0_118 = arith.constant 0 : index
    %305 = vector.load %arg10[%c0_116, %c0_117, %c0_118] : memref<8x8x32xf32, #tpu.memory_space<vmem>>, vector<8x8x32xf32>
    %306 = vector.extract_strided_slice %305 {offsets = [0, 0, 0], sizes = [8, 8, 16], strides = [1, 1, 1]} : vector<8x8x32xf32> to vector<8x8x16xf32>
    %c0_119 = arith.constant 0 : index
    %c0_120 = arith.constant 0 : index
    %c0_121 = arith.constant 0 : index
    %307 = vector.load %arg4[%c0_119, %c0_120, %c0_121] : memref<1x1x16xf32, #tpu.memory_space<vmem>>, vector<1x1x16xf32>
    %308 = vector.broadcast %307 : vector<1x1x16xf32> to vector<8x8x16xf32>
    %309 = arith.mulf %306, %308 : vector<8x8x16xf32>
    %cst_122 = arith.constant dense<0.000000e+00> : vector<8x8xf32>
    %310 = vector.multi_reduction <add>, %309, %cst_122 [2] : vector<8x8x16xf32> to vector<8x8xf32>
    %c0_123 = arith.constant 0 : index
    %c0_124 = arith.constant 0 : index
    %c0_125 = arith.constant 0 : index
    %311 = vector.load %arg11[%c0_123, %c0_124, %c0_125] : memref<8x8x32xf32, #tpu.memory_space<vmem>>, vector<8x8x32xf32>
    %312 = vector.extract_strided_slice %311 {offsets = [0, 0, 16], sizes = [8, 8, 16], strides = [1, 1, 1]} : vector<8x8x32xf32> to vector<8x8x16xf32>
    %c0_126 = arith.constant 0 : index
    %c0_127 = arith.constant 0 : index
    %c0_128 = arith.constant 0 : index
    %313 = vector.load %arg5[%c0_126, %c0_127, %c0_128] : memref<1x1x16xf32, #tpu.memory_space<vmem>>, vector<1x1x16xf32>
    %314 = vector.broadcast %313 : vector<1x1x16xf32> to vector<8x8x16xf32>
    %315 = arith.mulf %312, %314 : vector<8x8x16xf32>
    %cst_129 = arith.constant dense<0.000000e+00> : vector<8x8xf32>
    %316 = vector.multi_reduction <add>, %315, %cst_129 [2] : vector<8x8x16xf32> to vector<8x8xf32>
    %317 = arith.addf %310, %316 : vector<8x8xf32>
    %c0_130 = arith.constant 0 : index
    %c0_131 = arith.constant 0 : index
    %318 = vector.load %arg6[%c0_130, %c0_131] : memref<1x1xf32, #tpu.memory_space<vmem>>, vector<1x1xf32>
    %319 = vector.extract %318[0, 0] : f32 from vector<1x1xf32>
    %320 = vector.broadcast %319 : f32 to vector<8x8xf32>
    %321 = arith.addf %317, %320 : vector<8x8xf32>
    %cst_132 = arith.constant 0.000000e+00 : f32
    %322 = vector.broadcast %cst_132 : f32 to vector<8x8xf32>
    %323 = arith.maximumf %321, %322 : vector<8x8xf32>
    %c0_133 = arith.constant 0 : index
    %c0_134 = arith.constant 0 : index
    %324 = vector.load %arg9[%c0_133, %c0_134] : memref<8x8xf32, #tpu.memory_space<vmem>>, vector<8x8xf32>
    tpu.vector_store %arg9[%c0_133, %c0_134], %323 {strides = array<i32>} : memref<8x8xf32, #tpu.memory_space<vmem>>, vector<8x8xf32>,
    return
  }
}

</mosaic_0001>

<llo_original>
// kernel: net_forward_fused.1
$region0: #{net_forward_fused.1}
  #allocation0 [shape = 'u32[]', space=smem, size = 0x4, offset = 0x4, fixed_abs, tag = 'smem constant byte address 0x4 - core index']
  #allocation1 [shape = 'u32[72,128]{1,0:T(1,128)}', space=vmem, size = 0x9000, scoped, tag = 'internal scratch']
  #allocation2 [shape = 'f32[8,8,32]{2,1,0:T(8,128)}', space=vmem, size = 0x8000, scoped, tag = 'scratch operand']
  #allocation3 [shape = 'f32[8,8,32]{2,1,0:T(8,128)}', space=vmem, size = 0x8000, scoped, tag = 'scratch operand']
  #allocation4 [shape = 'f32[1,1]{1,0:T(1,128)S(1)}', space=vmem, size = 0x200, scoped, tag = 'scoped memory for net_forward_fused.1']
  %s0 = inlined_call_operand.vmem [shape: f32[64,32], index: 0, kind: input, shape index: {}]
  %s1 = inlined_call_operand.vmem [shape: f32[32,128], index: 1, kind: input, shape index: {}]
  %s2 = inlined_call_operand.vmem [shape: f32[32,128], index: 2, kind: input, shape index: {}]
  %s3 = inlined_call_operand.vmem [shape: f32[1,128], index: 3, kind: input, shape index: {}]
  %s4 = inlined_call_operand.vmem [shape: f32[1,1,16], index: 4, kind: input, shape index: {}]
  %s5 = inlined_call_operand.vmem [shape: f32[1,1,16], index: 5, kind: input, shape index: {}]
  %s6 = inlined_call_operand.<no memory space> [shape: f32[1,1], index: 6, kind: input, shape index: {}]
  %s7 = inlined_call_operand.vmem [shape: f32[8,32], index: 7, kind: input, shape index: {}]
  %s8 = inlined_call_operand.vmem [shape: f32[8,32], index: 8, kind: input, shape index: {}]
  %s9 = inlined_call_operand.vmem [shape: f32[8,8], index: 9, kind: output, shape index: {}]
  %s10 = sld [smem:[#allocation0]]
  $region46: #{net_forward_fused.1} parent=0
    _
  %s12 = ssub.s32 1, %s10
  %s13 = scalar_select 0, %s12, %s10
  %v14 = vstv %s6
  %15 = vst [vmem:[#allocation4] sm:$0x1] %v14
  // Predicated region
  $region2: #{net_forward_fused.1} parent=0 // pred_check
    _
  $region3: #{net_forward_fused.1} parent=0 // pred_check_branch
    %17 = sbr.rel (0) target = $region5
  $region4: #{net_forward_fused.1} parent=0 // pred_region
    _
  $region5: #{net_forward_fused.1} parent=0 // pred_fallthru
    _
  // Predicated region
  $region6: #{net_forward_fused.1} parent=0 // pred_check
    _
  $region7: #{net_forward_fused.1} parent=0 // pred_check_branch
    %19 = sbr.rel (0) target = $region9
  $region8: #{net_forward_fused.1} parent=0 // pred_region
    _
  $region9: #{net_forward_fused.1} parent=0 // pred_fallthru
    _
  // Predicated region
  $region10: #{net_forward_fused.1} parent=0 // pred_check
    _
  $region11: #{net_forward_fused.1} parent=0 // pred_check_branch
    %21 = sbr.rel (0) target = $region13
  $region12: #{net_forward_fused.1} parent=0 // pred_region
    _
  $region13: #{net_forward_fused.1} parent=0 // pred_fallthru
    _
  // Predicated region
  $region14: #{net_forward_fused.1} parent=0 // pred_check
    _
  $region15: #{net_forward_fused.1} parent=0 // pred_check_branch
    %23 = sbr.rel (0) target = $region17
  $region16: #{net_forward_fused.1} parent=0 // pred_region
    _
  $region17: #{net_forward_fused.1} parent=0 // pred_fallthru
    _
  // Predicated region
  $region18: #{net_forward_fused.1} parent=0 // pred_check
    _
  $region19: #{net_forward_fused.1} parent=0 // pred_check_branch
    %25 = sbr.rel (0) target = $region21
  $region20: #{net_forward_fused.1} parent=0 // pred_region
    _
  $region21: #{net_forward_fused.1} parent=0 // pred_fallthru
    _
  // Predicated region
  $region22: #{net_forward_fused.1} parent=0 // pred_check
    _
  $region23: #{net_forward_fused.1} parent=0 // pred_check_branch
    %27 = sbr.rel (0) target = $region25
  $region24: #{net_forward_fused.1} parent=0 // pred_region
    _
  $region25: #{net_forward_fused.1} parent=0 // pred_fallthru
    _
  // Predicated region
  $region26: #{net_forward_fused.1} parent=0 // pred_check
    _
  $region27: #{net_forward_fused.1} parent=0 // pred_check_branch
    %29 = sbr.rel (0) target = $region29
  $region28: #{net_forward_fused.1} parent=0 // pred_region
    _
  $region29: #{net_forward_fused.1} parent=0 // pred_fallthru
    _
  // Predicated region
  $region30: #{net_forward_fused.1} parent=0 // pred_check
    _
  $region31: #{net_forward_fused.1} parent=0 // pred_check_branch
    %31 = sbr.rel (0) target = $region33
  $region32: #{net_forward_fused.1} parent=0 // pred_region
    _
  $region33: #{net_forward_fused.1} parent=0 // pred_fallthru
    _
  // Predicated region
  $region34: #{net_forward_fused.1} parent=0 // pred_check
    _
  $region35: #{net_forward_fused.1} parent=0 // pred_check_branch
    %33 = sbr.rel (0) target = $region37
  $region36: #{net_forward_fused.1} parent=0 // pred_region
    _
  $region37: #{net_forward_fused.1} parent=0 // pred_fallthru
    _
  %v34 = vld [vmem:[%s0] sm:$0xff]
  %v35 = vld [vmem:[%s0 + $0x8] sm:$0xff]
  %v36 = vld [vmem:[%s0 + $0x10] sm:$0xff]
  %v37 = vld [vmem:[%s0 + $0x18] sm:$0xff]
  %v38 = vld [vmem:[%s0 + $0x20] sm:$0xff]
  %v39 = vld [vmem:[%s0 + $0x28] sm:$0xff]
  %v40 = vld [vmem:[%s0 + $0x30] sm:$0xff]
  %v41 = vld [vmem:[%s0 + $0x38] sm:$0xff]
  %v42 = vld [vmem:[%s1] sm:$0xff]
  %v43 = vld [vmem:[%s1 + $0x8] sm:$0xff]
  %v44 = vld [vmem:[%s1 + $0x10] sm:$0xff]
  %v45 = vld [vmem:[%s1 + $0x18] sm:$0xff]
  %v46 = vld [vmem:[%s3] sm:$0x1]
  %v48 = vperm.slane %v46, 0
  %vm50 = vcmask 261120
  %v52 = vsel %vm50, %v34, 0
  %v55 = vsel %vm50, %v35, 0
  %v58 = vsel %vm50, %v36, 0
  %v61 = vsel %vm50, %v37, 0
  %v64 = vsel %vm50, %v38, 0
  %v67 = vsel %vm50, %v39, 0
  %v70 = vsel %vm50, %v40, 0
  %v73 = vsel %vm50, %v41, 0
  %75 = vmatpush.msra.mxu0 0.0
  %76 = vmatpush.msra.mxu0 0.0
  %77 = vmatpush.msra.mxu0 0.0
  %78 = vmatpush.msra.mxu0 0.0
  %79 = vmatpush.msra.mxu0 0.0
  %80 = vmatpush.msra.mxu0 0.0
  %81 = vmatpush.msra.mxu0 0.0
  %82 = vmatpush.msra.mxu0 0.0
  %83 = vmatpush.msra.mxu0 0.0
  %84 = vmatpush.msra.mxu0 0.0
  %85 = vmatpush.msra.mxu0 0.0
  %86 = vmatpush.msra.mxu0 0.0
  %87 = vmatpush.msra.mxu0 %v45
  %88 = vmatpush.msra.mxu0 %v44
  %89 = vmatpush.msra.mxu0 %v43
  %90 = vmatpush.msra.mxu0 %v42
  %91 = vmatmul.f32.gmra.mxu0 %v52
  %v92 = vpop.f32.mrf.mxu0
  %v93 = vadd.f32 %v48, %v92
  %94 = vmatmul.f32.gmra.mxu0 %v55
  %v95 = vpop.f32.mrf.mxu0
  %v96 = vadd.f32 %v48, %v95
  %97 = vmatmul.f32.gmra.mxu0 %v58
  %v98 = vpop.f32.mrf.mxu0
  %v99 = vadd.f32 %v48, %v98
  %100 = vmatmul.f32.gmra.mxu0 %v61
  %v101 = vpop.f32.mrf.mxu0
  %v102 = vadd.f32 %v48, %v101
  %103 = vmatmul.f32.gmra.mxu0 %v64
  %v104 = vpop.f32.mrf.mxu0
  %v105 = vadd.f32 %v48, %v104
  %106 = vmatmul.f32.gmra.mxu0 %v67
  %v107 = vpop.f32.mrf.mxu0
  %v108 = vadd.f32 %v48, %v107
  %109 = vmatmul.f32.gmra.mxu0 %v70
  %v110 = vpop.f32.mrf.mxu0
  %v111 = vadd.f32 %v48, %v110
  %112 = vmatmul.f32.gmra.mxu0 %v73
  %v113 = vpop.f32.mrf.mxu0
  %v114 = vadd.f32 %v48, %v113
  %115 = vdwg.mxu0
  %v116 = vld [vmem:[%s2] sm:$0xff]
  %v117 = vld [vmem:[%s2 + $0x8] sm:$0xff]
  %v118 = vld [vmem:[%s2 + $0x10] sm:$0xff]
  %v119 = vld [vmem:[%s2 + $0x18] sm:$0xff]
  %v120 = vld [vmem:[%s7] sm:$0xff]
  %v121 = vld [vmem:[%s8] sm:$0xff]
  %v123 = vsel %vm50, %v120, 0
  %125 = vmatpush.msra.mxu0 0.0
  %126 = vmatpush.msra.mxu0 0.0
  %127 = vmatpush.msra.mxu0 0.0
  %128 = vmatpush.msra.mxu0 0.0
  %129 = vmatpush.msra.mxu0 0.0
  %130 = vmatpush.msra.mxu0 0.0
  %131 = vmatpush.msra.mxu0 0.0
  %132 = vmatpush.msra.mxu0 0.0
  %133 = vmatpush.msra.mxu0 0.0
  %134 = vmatpush.msra.mxu0 0.0
  %135 = vmatpush.msra.mxu0 0.0
  %136 = vmatpush.msra.mxu0 0.0
  %137 = vmatpush.msra.mxu0 %v119
  %138 = vmatpush.msra.mxu0 %v118
  %139 = vmatpush.msra.mxu0 %v117
  %140 = vmatpush.msra.mxu0 %v116
  %141 = vmatmul.f32.gmra.mxu0 %v123
  %v142 = vpop.f32.mrf.mxu0
  %v143 = vadd.f32 %v93, %v142
  %144 = vdwg.mxu0
  %v145 = vxor.u32 %v143, 2147483648
  %v146 = vmul.f32 %v145, 1.442695
  %v147 = vpow.pop %v146
  %v148 = vadd.f32 %v147, 1.0
  %v149 = vrcp.pop %v148
  %v150 = vmul.f32 %v148, %v149
  %v151 = vsub.f32 1.0, %v150
  %v152 = vmul.f32 %v149, %v151
  %v153 = vadd.f32 %v149, %v152
  %vm154 = vweird.f32 %v148
  %vm155 = vweird.f32 %v149
  %vm156 = vmor %vm154, %vm155
  %v157 = vsel %vm156, %v149, %v153
  %v158 = vand.u32 2147483647, %v148
  %vm159 = vcmp.eq.f32.partialorder %v158, 8.507059e+37
  %v160 = vand.u32 %v148, 2147483648
  %v161 = vor.u32 1.1754944e-38, %v160
  %v162 = vsel %vm159, %v161, %v157
  %v163 = vmul.f32 1.0, %v162
  %v164 = vmul.f32 %v163, 2.0
  %v165 = vsub.f32 %v164, 1.0
  %167 = vrot.lane.b32.xlu0 %v121, 32
  %v168 = vpop.permute.xlu0 %167
  %v170 = vmul.f32 %v163, %v168
  %172 = vrot.lane.b32.xlu0 %v165, 64
  %v173 = vpop.permute.xlu0 %172
  %v175 = vmul.f32 %v163, %v173
  %177 = vrot.lane.b32.xlu0 %v175, 32
  %v178 = vpop.permute.xlu0 %177
  %v180 = vadd.f32 %v170, %v178
  %v181 = vmul.f32 %v180, 2.0
  %v182 = vxor.u32 %v181, 2147483648
  %v183 = vmul.f32 %v182, 1.442695
  %v184 = vpow.pop %v183
  %v185 = vadd.f32 %v184, 1.0
  %v186 = vrcp.pop %v185
  %v187 = vmul.f32 %v185, %v186
  %v188 = vsub.f32 1.0, %v187
  %v189 = vmul.f32 %v186, %v188
  %v190 = vadd.f32 %v186, %v189
  %vm191 = vweird.f32 %v185
  %vm192 = vweird.f32 %v186
  %vm193 = vmor %vm191, %vm192
  %v194 = vsel %vm193, %v186, %v190
  %v195 = vand.u32 2147483647, %v185
  %vm196 = vcmp.eq.f32.partialorder %v195, 8.507059e+37
  %v197 = vand.u32 %v185, 2147483648
  %v198 = vor.u32 1.1754944e-38, %v197
  %v199 = vsel %vm196, %v198, %v194
  %v200 = vmul.f32 1.0, %v199
  %v201 = vmul.f32 %v200, 2.0
  %v202 = vsub.f32 %v201, 1.0
  %204 = vrot.lane.b32.xlu0 %v202, 64
  %v205 = vpop.permute.xlu0 %204
  %v207 = vmul.f32 %v163, %v205
  %209 = vrot.lane.b32.xlu0 %v207, 32
  %v210 = vpop.permute.xlu0 %209
  %212 = vst.msk [vmem:[#allocation2] sm:$0xff] %vm50, %v210
  %s213 = scalar_lea.vmem [#allocation3], 56
  %214 = vst.msk [vmem:[%s213] sm:$0xff] %vm50, %v210
  %v215 = vsel %vm50, %v210, 0
  %217 = vmatpush.msra.mxu0 0.0
  %218 = vmatpush.msra.mxu0 0.0
  %219 = vmatpush.msra.mxu0 0.0
  %220 = vmatpush.msra.mxu0 0.0
  %221 = vmatpush.msra.mxu0 0.0
  %222 = vmatpush.msra.mxu0 0.0
  %223 = vmatpush.msra.mxu0 0.0
  %224 = vmatpush.msra.mxu0 0.0
  %225 = vmatpush.msra.mxu0 0.0
  %226 = vmatpush.msra.mxu0 0.0
  %227 = vmatpush.msra.mxu0 0.0
  %228 = vmatpush.msra.mxu0 0.0
  %229 = vmatpush.msra.mxu0 %v119
  %230 = vmatpush.msra.mxu0 %v118
  %231 = vmatpush.msra.mxu0 %v117
  %232 = vmatpush.msra.mxu0 %v116
  %233 = vmatmul.f32.gmra.mxu0 %v215
  %v234 = vpop.f32.mrf.mxu0
  %v235 = vadd.f32 %v96, %v234
  %236 = vdwg.mxu0
  %v237 = vxor.u32 %v235, 2147483648
  %v238 = vmul.f32 %v237, 1.442695
  %v239 = vpow.pop %v238
  %v240 = vadd.f32 %v239, 1.0
  %v241 = vrcp.pop %v240
  %v242 = vmul.f32 %v240, %v241
  %v243 = vsub.f32 1.0, %v242
  %v244 = vmul.f32 %v241, %v243
  %v245 = vadd.f32 %v241, %v244
  %vm246 = vweird.f32 %v240
  %vm247 = vweird.f32 %v241
  %vm248 = vmor %vm246, %vm247
  %v249 = vsel %vm248, %v241, %v245
  %v250 = vand.u32 2147483647, %v240
  %vm251 = vcmp.eq.f32.partialorder %v250, 8.507059e+37
  %v252 = vand.u32 %v240, 2147483648
  %v253 = vor.u32 1.1754944e-38, %v252
  %v254 = vsel %vm251, %v253, %v249
  %v255 = vmul.f32 1.0, %v254
  %v256 = vmul.f32 %v255, 2.0
  %v257 = vsub.f32 %v256, 1.0
  %v258 = vmul.f32 %v255, %v180
  %260 = vrot.lane.b32.xlu0 %v257, 64
  %v261 = vpop.permute.xlu0 %260
  %v263 = vmul.f32 %v255, %v261
  %265 = vrot.lane.b32.xlu0 %v263, 32
  %v266 = vpop.permute.xlu0 %265
  %v268 = vadd.f32 %v258, %v266
  %v269 = vmul.f32 %v268, 2.0
  %v270 = vxor.u32 %v269, 2147483648
  %v271 = vmul.f32 %v270, 1.442695
  %v272 = vpow.pop %v271
  %v273 = vadd.f32 %v272, 1.0
  %v274 = vrcp.pop %v273
  %v275 = vmul.f32 %v273, %v274
  %v276 = vsub.f32 1.0, %v275
  %v277 = vmul.f32 %v274, %v276
  %v278 = vadd.f32 %v274, %v277
  %vm279 = vweird.f32 %v273
  %vm280 = vweird.f32 %v274
  %vm281 = vmor %vm279, %vm280
  %v282 = vsel %vm281, %v274, %v278
  %v283 = vand.u32 2147483647, %v273
  %vm284 = vcmp.eq.f32.partialorder %v283, 8.507059e+37
  %v285 = vand.u32 %v273, 2147483648
  %v286 = vor.u32 1.1754944e-38, %v285
  %v287 = vsel %vm284, %v286, %v282
  %v288 = vmul.f32 1.0, %v287
  %v289 = vmul.f32 %v288, 2.0
  %v290 = vsub.f32 %v289, 1.0
  %292 = vrot.lane.b32.xlu0 %v290, 64
  %v293 = vpop.permute.xlu0 %292
  %v295 = vmul.f32 %v255, %v293
  %297 = vrot.lane.b32.xlu0 %v295, 32
  %v298 = vpop.permute.xlu0 %297
  %s300 = scalar_lea.vmem [#allocation2], 8
  %301 = vst.msk [vmem:[%s300] sm:$0xff] %vm50, %v298
  %s302 = scalar_lea.vmem [#allocation3], 48
  %303 = vst.msk [vmem:[%s302] sm:$0xff] %vm50, %v298
  %v304 = vsel %vm50, %v298, 0
  %306 = vmatpush.msra.mxu0 0.0
  %307 = vmatpush.msra.mxu0 0.0
  %308 = vmatpush.msra.mxu0 0.0
  %309 = vmatpush.msra.mxu0 0.0
  %310 = vmatpush.msra.mxu0 0.0
  %311 = vmatpush.msra.mxu0 0.0
  %312 = vmatpush.msra.mxu0 0.0
  %313 = vmatpush.msra.mxu0 0.0
  %314 = vmatpush.msra.mxu0 0.0
  %315 = vmatpush.msra.mxu0 0.0
  %316 = vmatpush.msra.mxu0 0.0
  %317 = vmatpush.msra.mxu0 0.0
  %318 = vmatpush.msra.mxu0 %v119
  %319 = vmatpush.msra.mxu0 %v118
  %320 = vmatpush.msra.mxu0 %v117
  %321 = vmatpush.msra.mxu0 %v116
  %322 = vmatmul.f32.gmra.mxu0 %v304
  %v323 = vpop.f32.mrf.mxu0
  %v324 = vadd.f32 %v99, %v323
  %325 = vdwg.mxu0
  %v326 = vxor.u32 %v324, 2147483648
  %v327 = vmul.f32 %v326, 1.442695
  %v328 = vpow.pop %v327
  %v329 = vadd.f32 %v328, 1.0
  %v330 = vrcp.pop %v329
  %v331 = vmul.f32 %v329, %v330
  %v332 = vsub.f32 1.0, %v331
  %v333 = vmul.f32 %v330, %v332
  %v334 = vadd.f32 %v330, %v333
  %vm335 = vweird.f32 %v329
  %vm336 = vweird.f32 %v330
  %vm337 = vmor %vm335, %vm336
  %v338 = vsel %vm337, %v330, %v334
  %v339 = vand.u32 2147483647, %v329
  %vm340 = vcmp.eq.f32.partialorder %v339, 8.507059e+37
  %v341 = vand.u32 %v329, 2147483648
  %v342 = vor.u32 1.1754944e-38, %v341
  %v343 = vsel %vm340, %v342, %v338
  %v344 = vmul.f32 1.0, %v343
  %v345 = vmul.f32 %v344, 2.0
  %v346 = vsub.f32 %v345, 1.0
  %v347 = vmul.f32 %v344, %v268
  %349 = vrot.lane.b32.xlu0 %v346, 64
  %v350 = vpop.permute.xlu0 %349
  %v352 = vmul.f32 %v344, %v350
  %354 = vrot.lane.b32.xlu0 %v352, 32
  %v355 = vpop.permute.xlu0 %354
  %v357 = vadd.f32 %v347, %v355
  %v358 = vmul.f32 %v357, 2.0
  %v359 = vxor.u32 %v358, 2147483648
  %v360 = vmul.f32 %v359, 1.442695
  %v361 = vpow.pop %v360
  %v362 = vadd.f32 %v361, 1.0
  %v363 = vrcp.pop %v362
  %v364 = vmul.f32 %v362, %v363
  %v365 = vsub.f32 1.0, %v364
  %v366 = vmul.f32 %v363, %v365
  %v367 = vadd.f32 %v363, %v366
  %vm368 = vweird.f32 %v362
  %vm369 = vweird.f32 %v363
  %vm370 = vmor %vm368, %vm369
  %v371 = vsel %vm370, %v363, %v367
  %v372 = vand.u32 2147483647, %v362
  %vm373 = vcmp.eq.f32.partialorder %v372, 8.507059e+37
  %v374 = vand.u32 %v362, 2147483648
  %v375 = vor.u32 1.1754944e-38, %v374
  %v376 = vsel %vm373, %v375, %v371
  %v377 = vmul.f32 1.0, %v376
  %v378 = vmul.f32 %v377, 2.0
  %v379 = vsub.f32 %v378, 1.0
  %381 = vrot.lane.b32.xlu0 %v379, 64
  %v382 = vpop.permute.xlu0 %381
  %v384 = vmul.f32 %v344, %v382
  %386 = vrot.lane.b32.xlu0 %v384, 32
  %v387 = vpop.permute.xlu0 %386
  %s389 = scalar_lea.vmem [#allocation2], 16
  %390 = vst.msk [vmem:[%s389] sm:$0xff] %vm50, %v387
  %s391 = scalar_lea.vmem [#allocation3], 40
  %392 = vst.msk [vmem:[%s391] sm:$0xff] %vm50, %v387
  %v393 = vsel %vm50, %v387, 0
  %395 = vmatpush.msra.mxu0 0.0
  %396 = vmatpush.msra.mxu0 0.0
  %397 = vmatpush.msra.mxu0 0.0
  %398 = vmatpush.msra.mxu0 0.0
  %399 = vmatpush.msra.mxu0 0.0
  %400 = vmatpush.msra.mxu0 0.0
  %401 = vmatpush.msra.mxu0 0.0
  %402 = vmatpush.msra.mxu0 0.0
  %403 = vmatpush.msra.mxu0 0.0
  %404 = vmatpush.msra.mxu0 0.0
  %405 = vmatpush.msra.mxu0 0.0
  %406 = vmatpush.msra.mxu0 0.0
  %407 = vmatpush.msra.mxu0 %v119
  %408 = vmatpush.msra.mxu0 %v118
  %409 = vmatpush.msra.mxu0 %v117
  %410 = vmatpush.msra.mxu0 %v116
  %411 = vmatmul.f32.gmra.mxu0 %v393
  %v412 = vpop.f32.mrf.mxu0
  %v413 = vadd.f32 %v102, %v412
  %414 = vdwg.mxu0
  %v415 = vxor.u32 %v413, 2147483648
  %v416 = vmul.f32 %v415, 1.442695
  %v417 = vpow.pop %v416
  %v418 = vadd.f32 %v417, 1.0
  %v419 = vrcp.pop %v418
  %v420 = vmul.f32 %v418, %v419
  %v421 = vsub.f32 1.0, %v420
  %v422 = vmul.f32 %v419, %v421
  %v423 = vadd.f32 %v419, %v422
  %vm424 = vweird.f32 %v418
  %vm425 = vweird.f32 %v419
  %vm426 = vmor %vm424, %vm425
  %v427 = vsel %vm426, %v419, %v423
  %v428 = vand.u32 2147483647, %v418
  %vm429 = vcmp.eq.f32.partialorder %v428, 8.507059e+37
  %v430 = vand.u32 %v418, 2147483648
  %v431 = vor.u32 1.1754944e-38, %v430
  %v432 = vsel %vm429, %v431, %v427
  %v433 = vmul.f32 1.0, %v432
  %v434 = vmul.f32 %v433, 2.0
  %v435 = vsub.f32 %v434, 1.0
  %v436 = vmul.f32 %v433, %v357
  %438 = vrot.lane.b32.xlu0 %v435, 64
  %v439 = vpop.permute.xlu0 %438
  %v441 = vmul.f32 %v433, %v439
  %443 = vrot.lane.b32.xlu0 %v441, 32
  %v444 = vpop.permute.xlu0 %443
  %v446 = vadd.f32 %v436, %v444
  %v447 = vmul.f32 %v446, 2.0
  %v448 = vxor.u32 %v447, 2147483648
  %v449 = vmul.f32 %v448, 1.442695
  %v450 = vpow.pop %v449
  %v451 = vadd.f32 %v450, 1.0
  %v452 = vrcp.pop %v451
  %v453 = vmul.f32 %v451, %v452
  %v454 = vsub.f32 1.0, %v453
  %v455 = vmul.f32 %v452, %v454
  %v456 = vadd.f32 %v452, %v455
  %vm457 = vweird.f32 %v451
  %vm458 = vweird.f32 %v452
  %vm459 = vmor %vm457, %vm458
  %v460 = vsel %vm459, %v452, %v456
  %v461 = vand.u32 2147483647, %v451
  %vm462 = vcmp.eq.f32.partialorder %v461, 8.507059e+37
  %v463 = vand.u32 %v451, 2147483648
  %v464 = vor.u32 1.1754944e-38, %v463
  %v465 = vsel %vm462, %v464, %v460
  %v466 = vmul.f32 1.0, %v465
  %v467 = vmul.f32 %v466, 2.0
  %v468 = vsub.f32 %v467, 1.0
  %470 = vrot.lane.b32.xlu0 %v468, 64
  %v471 = vpop.permute.xlu0 %470
  %v473 = vmul.f32 %v433, %v471
  %475 = vrot.lane.b32.xlu0 %v473, 32
  %v476 = vpop.permute.xlu0 %475
  %s478 = scalar_lea.vmem [#allocation2], 24
  %479 = vst.msk [vmem:[%s478] sm:$0xff] %vm50, %v476
  %s480 = scalar_lea.vmem [#allocation3], 32
  %481 = vst.msk [vmem:[%s480] sm:$0xff] %vm50, %v476
  %v482 = vsel %vm50, %v476, 0
  %484 = vmatpush.msra.mxu0 0.0
  %485 = vmatpush.msra.mxu0 0.0
  %486 = vmatpush.msra.mxu0 0.0
  %487 = vmatpush.msra.mxu0 0.0
  %488 = vmatpush.msra.mxu0 0.0
  %489 = vmatpush.msra.mxu0 0.0
  %490 = vmatpush.msra.mxu0 0.0
  %491 = vmatpush.msra.mxu0 0.0
  %492 = vmatpush.msra.mxu0 0.0
  %493 = vmatpush.msra.mxu0 0.0
  %494 = vmatpush.msra.mxu0 0.0
  %495 = vmatpush.msra.mxu0 0.0
  %496 = vmatpush.msra.mxu0 %v119
  %497 = vmatpush.msra.mxu0 %v118
  %498 = vmatpush.msra.mxu0 %v117
  %499 = vmatpush.msra.mxu0 %v116
  %500 = vmatmul.f32.gmra.mxu0 %v482
  %v501 = vpop.f32.mrf.mxu0
  %v502 = vadd.f32 %v105, %v501
  %503 = vdwg.mxu0
  %v504 = vxor.u32 %v502, 2147483648
  %v505 = vmul.f32 %v504, 1.442695
  %v506 = vpow.pop %v505
  %v507 = vadd.f32 %v506, 1.0
  %v508 = vrcp.pop %v507
  %v509 = vmul.f32 %v507, %v508
  %v510 = vsub.f32 1.0, %v509
  %v511 = vmul.f32 %v508, %v510
  %v512 = vadd.f32 %v508, %v511
  %vm513 = vweird.f32 %v507
  %vm514 = vweird.f32 %v508
  %vm515 = vmor %vm513, %vm514
  %v516 = vsel %vm515, %v508, %v512
  %v517 = vand.u32 2147483647, %v507
  %vm518 = vcmp.eq.f32.partialorder %v517, 8.507059e+37
  %v519 = vand.u32 %v507, 2147483648
  %v520 = vor.u32 1.1754944e-38, %v519
  %v521 = vsel %vm518, %v520, %v516
  %v522 = vmul.f32 1.0, %v521
  %v523 = vmul.f32 %v522, 2.0
  %v524 = vsub.f32 %v523, 1.0
  %v525 = vmul.f32 %v522, %v446
  %527 = vrot.lane.b32.xlu0 %v524, 64
  %v528 = vpop.permute.xlu0 %527
  %v530 = vmul.f32 %v522, %v528
  %532 = vrot.lane.b32.xlu0 %v530, 32
  %v533 = vpop.permute.xlu0 %532
  %v535 = vadd.f32 %v525, %v533
  %v536 = vmul.f32 %v535, 2.0
  %v537 = vxor.u32 %v536, 2147483648
  %v538 = vmul.f32 %v537, 1.442695
  %v539 = vpow.pop %v538
  %v540 = vadd.f32 %v539, 1.0
  %v541 = vrcp.pop %v540
  %v542 = vmul.f32 %v540, %v541
  %v543 = vsub.f32 1.0, %v542
  %v544 = vmul.f32 %v541, %v543
  %v545 = vadd.f32 %v541, %v544
  %vm546 = vweird.f32 %v540
  %vm547 = vweird.f32 %v541
  %vm548 = vmor %vm546, %vm547
  %v549 = vsel %vm548, %v541, %v545
  %v550 = vand.u32 2147483647, %v540
  %vm551 = vcmp.eq.f32.partialorder %v550, 8.507059e+37
  %v552 = vand.u32 %v540, 2147483648
  %v553 = vor.u32 1.1754944e-38, %v552
  %v554 = vsel %vm551, %v553, %v549
  %v555 = vmul.f32 1.0, %v554
  %v556 = vmul.f32 %v555, 2.0
  %v557 = vsub.f32 %v556, 1.0
  %559 = vrot.lane.b32.xlu0 %v557, 64
  %v560 = vpop.permute.xlu0 %559
  %v562 = vmul.f32 %v522, %v560
  %564 = vrot.lane.b32.xlu0 %v562, 32
  %v565 = vpop.permute.xlu0 %564
  %s567 = scalar_lea.vmem [#allocation2], 32
  %568 = vst.msk [vmem:[%s567] sm:$0xff] %vm50, %v565
  %s569 = scalar_lea.vmem [#allocation3], 24
  %570 = vst.msk [vmem:[%s569] sm:$0xff] %vm50, %v565
  %v571 = vsel %vm50, %v565, 0
  %573 = vmatpush.msra.mxu0 0.0
  %574 = vmatpush.msra.mxu0 0.0
  %575 = vmatpush.msra.mxu0 0.0
  %576 = vmatpush.msra.mxu0 0.0
  %577 = vmatpush.msra.mxu0 0.0
  %578 = vmatpush.msra.mxu0 0.0
  %579 = vmatpush.msra.mxu0 0.0
  %580 = vmatpush.msra.mxu0 0.0
  %581 = vmatpush.msra.mxu0 0.0
  %582 = vmatpush.msra.mxu0 0.0
  %583 = vmatpush.msra.mxu0 0.0
  %584 = vmatpush.msra.mxu0 0.0
  %585 = vmatpush.msra.mxu0 %v119
  %586 = vmatpush.msra.mxu0 %v118
  %587 = vmatpush.msra.mxu0 %v117
  %588 = vmatpush.msra.mxu0 %v116
  %589 = vmatmul.f32.gmra.mxu0 %v571
  %v590 = vpop.f32.mrf.mxu0
  %v591 = vadd.f32 %v108, %v590
  %592 = vdwg.mxu0
  %v593 = vxor.u32 %v591, 2147483648
  %v594 = vmul.f32 %v593, 1.442695
  %v595 = vpow.pop %v594
  %v596 = vadd.f32 %v595, 1.0
  %v597 = vrcp.pop %v596
  %v598 = vmul.f32 %v596, %v597
  %v599 = vsub.f32 1.0, %v598
  %v600 = vmul.f32 %v597, %v599
  %v601 = vadd.f32 %v597, %v600
  %vm602 = vweird.f32 %v596
  %vm603 = vweird.f32 %v597
  %vm604 = vmor %vm602, %vm603
  %v605 = vsel %vm604, %v597, %v601
  %v606 = vand.u32 2147483647, %v596
  %vm607 = vcmp.eq.f32.partialorder %v606, 8.507059e+37
  %v608 = vand.u32 %v596, 2147483648
  %v609 = vor.u32 1.1754944e-38, %v608
  %v610 = vsel %vm607, %v609, %v605
  %v611 = vmul.f32 1.0, %v610
  %v612 = vmul.f32 %v611, 2.0
  %v613 = vsub.f32 %v612, 1.0
  %v614 = vmul.f32 %v611, %v535
  %616 = vrot.lane.b32.xlu0 %v613, 64
  %v617 = vpop.permute.xlu0 %616
  %v619 = vmul.f32 %v611, %v617
  %621 = vrot.lane.b32.xlu0 %v619, 32
  %v622 = vpop.permute.xlu0 %621
  %v624 = vadd.f32 %v614, %v622
  %v625 = vmul.f32 %v624, 2.0
  %v626 = vxor.u32 %v625, 2147483648
  %v627 = vmul.f32 %v626, 1.442695
  %v628 = vpow.pop %v627
  %v629 = vadd.f32 %v628, 1.0
  %v630 = vrcp.pop %v629
  %v631 = vmul.f32 %v629, %v630
  %v632 = vsub.f32 1.0, %v631
  %v633 = vmul.f32 %v630, %v632
  %v634 = vadd.f32 %v630, %v633
  %vm635 = vweird.f32 %v629
  %vm636 = vweird.f32 %v630
  %vm637 = vmor %vm635, %vm636
  %v638 = vsel %vm637, %v630, %v634
  %v639 = vand.u32 2147483647, %v629
  %vm640 = vcmp.eq.f32.partialorder %v639, 8.507059e+37
  %v641 = vand.u32 %v629, 2147483648
  %v642 = vor.u32 1.1754944e-38, %v641
  %v643 = vsel %vm640, %v642, %v638
  %v644 = vmul.f32 1.0, %v643
  %v645 = vmul.f32 %v644, 2.0
  %v646 = vsub.f32 %v645, 1.0
  %648 = vrot.lane.b32.xlu0 %v646, 64
  %v649 = vpop.permute.xlu0 %648
  %v651 = vmul.f32 %v611, %v649
  %653 = vrot.lane.b32.xlu0 %v651, 32
  %v654 = vpop.permute.xlu0 %653
  %s656 = scalar_lea.vmem [#allocation2], 40
  %657 = vst.msk [vmem:[%s656] sm:$0xff] %vm50, %v654
  %s658 = scalar_lea.vmem [#allocation3], 16
  %659 = vst.msk [vmem:[%s658] sm:$0xff] %vm50, %v654
  %v660 = vsel %vm50, %v654, 0
  %662 = vmatpush.msra.mxu0 0.0
  %663 = vmatpush.msra.mxu0 0.0
  %664 = vmatpush.msra.mxu0 0.0
  %665 = vmatpush.msra.mxu0 0.0
  %666 = vmatpush.msra.mxu0 0.0
  %667 = vmatpush.msra.mxu0 0.0
  %668 = vmatpush.msra.mxu0 0.0
  %669 = vmatpush.msra.mxu0 0.0
  %670 = vmatpush.msra.mxu0 0.0
  %671 = vmatpush.msra.mxu0 0.0
  %672 = vmatpush.msra.mxu0 0.0
  %673 = vmatpush.msra.mxu0 0.0
  %674 = vmatpush.msra.mxu0 %v119
  %675 = vmatpush.msra.mxu0 %v118
  %676 = vmatpush.msra.mxu0 %v117
  %677 = vmatpush.msra.mxu0 %v116
  %678 = vmatmul.f32.gmra.mxu0 %v660
  %v679 = vpop.f32.mrf.mxu0
  %v680 = vadd.f32 %v111, %v679
  %681 = vdwg.mxu0
  %v682 = vxor.u32 %v680, 2147483648
  %v683 = vmul.f32 %v682, 1.442695
  %v684 = vpow.pop %v683
  %v685 = vadd.f32 %v684, 1.0
  %v686 = vrcp.pop %v685
  %v687 = vmul.f32 %v685, %v686
  %v688 = vsub.f32 1.0, %v687
  %v689 = vmul.f32 %v686, %v688
  %v690 = vadd.f32 %v686, %v689
  %vm691 = vweird.f32 %v685
  %vm692 = vweird.f32 %v686
  %vm693 = vmor %vm691, %vm692
  %v694 = vsel %vm693, %v686, %v690
  %v695 = vand.u32 2147483647, %v685
  %vm696 = vcmp.eq.f32.partialorder %v695, 8.507059e+37
  %v697 = vand.u32 %v685, 2147483648
  %v698 = vor.u32 1.1754944e-38, %v697
  %v699 = vsel %vm696, %v698, %v694
  %v700 = vmul.f32 1.0, %v699
  %v701 = vmul.f32 %v700, 2.0
  %v702 = vsub.f32 %v701, 1.0
  %v703 = vmul.f32 %v700, %v624
  %705 = vrot.lane.b32.xlu0 %v702, 64
  %v706 = vpop.permute.xlu0 %705
  %v708 = vmul.f32 %v700, %v706
  %710 = vrot.lane.b32.xlu0 %v708, 32
  %v711 = vpop.permute.xlu0 %710
  %v713 = vadd.f32 %v703, %v711
  %v714 = vmul.f32 %v713, 2.0
  %v715 = vxor.u32 %v714, 2147483648
  %v716 = vmul.f32 %v715, 1.442695
  %v717 = vpow.pop %v716
  %v718 = vadd.f32 %v717, 1.0
  %v719 = vrcp.pop %v718
  %v720 = vmul.f32 %v718, %v719
  %v721 = vsub.f32 1.0, %v720
  %v722 = vmul.f32 %v719, %v721
  %v723 = vadd.f32 %v719, %v722
  %vm724 = vweird.f32 %v718
  %vm725 = vweird.f32 %v719
  %vm726 = vmor %vm724, %vm725
  %v727 = vsel %vm726, %v719, %v723
  %v728 = vand.u32 2147483647, %v718
  %vm729 = vcmp.eq.f32.partialorder %v728, 8.507059e+37
  %v730 = vand.u32 %v718, 2147483648
  %v731 = vor.u32 1.1754944e-38, %v730
  %v732 = vsel %vm729, %v731, %v727
  %v733 = vmul.f32 1.0, %v732
  %v734 = vmul.f32 %v733, 2.0
  %v735 = vsub.f32 %v734, 1.0
  %737 = vrot.lane.b32.xlu0 %v735, 64
  %v738 = vpop.permute.xlu0 %737
  %v740 = vmul.f32 %v700, %v738
  %742 = vrot.lane.b32.xlu0 %v740, 32
  %v743 = vpop.permute.xlu0 %742
  %s745 = scalar_lea.vmem [#allocation2], 48
  %746 = vst.msk [vmem:[%s745] sm:$0xff] %vm50, %v743
  %s747 = scalar_lea.vmem [#allocation3], 8
  %748 = vst.msk [vmem:[%s747] sm:$0xff] %vm50, %v743
  %v749 = vsel %vm50, %v743, 0
  %751 = vmatpush.msra.mxu0 0.0
  %752 = vmatpush.msra.mxu0 0.0
  %753 = vmatpush.msra.mxu0 0.0
  %754 = vmatpush.msra.mxu0 0.0
  %755 = vmatpush.msra.mxu0 0.0
  %756 = vmatpush.msra.mxu0 0.0
  %757 = vmatpush.msra.mxu0 0.0
  %758 = vmatpush.msra.mxu0 0.0
  %759 = vmatpush.msra.mxu0 0.0
  %760 = vmatpush.msra.mxu0 0.0
  %761 = vmatpush.msra.mxu0 0.0
  %762 = vmatpush.msra.mxu0 0.0
  %763 = vmatpush.msra.mxu0 %v119
  %764 = vmatpush.msra.mxu0 %v118
  %765 = vmatpush.msra.mxu0 %v117
  %766 = vmatpush.msra.mxu0 %v116
  %767 = vmatmul.f32.gmra.mxu0 %v749
  %v768 = vpop.f32.mrf.mxu0
  %v769 = vadd.f32 %v114, %v768
  %770 = vdwg.mxu0
  %v771 = vxor.u32 %v769, 2147483648
  %v772 = vmul.f32 %v771, 1.442695
  %v773 = vpow.pop %v772
  %v774 = vadd.f32 %v773, 1.0
  %v775 = vrcp.pop %v774
  %v776 = vmul.f32 %v774, %v775
  %v777 = vsub.f32 1.0, %v776
  %v778 = vmul.f32 %v775, %v777
  %v779 = vadd.f32 %v775, %v778
  %vm780 = vweird.f32 %v774
  %vm781 = vweird.f32 %v775
  %vm782 = vmor %vm780, %vm781
  %v783 = vsel %vm782, %v775, %v779
  %v784 = vand.u32 2147483647, %v774
  %vm785 = vcmp.eq.f32.partialorder %v784, 8.507059e+37
  %v786 = vand.u32 %v774, 2147483648
  %v787 = vor.u32 1.1754944e-38, %v786
  %v788 = vsel %vm785, %v787, %v783
  %v789 = vmul.f32 1.0, %v788
  %v790 = vmul.f32 %v789, 2.0
  %v791 = vsub.f32 %v790, 1.0
  %v792 = vmul.f32 %v789, %v713
  %794 = vrot.lane.b32.xlu0 %v791, 64
  %v795 = vpop.permute.xlu0 %794
  %v797 = vmul.f32 %v789, %v795
  %799 = vrot.lane.b32.xlu0 %v797, 32
  %v800 = vpop.permute.xlu0 %799
  %v802 = vadd.f32 %v792, %v800
  %v803 = vmul.f32 %v802, 2.0
  %v804 = vxor.u32 %v803, 2147483648
  %v805 = vmul.f32 %v804, 1.442695
  %v806 = vpow.pop %v805
  %v807 = vadd.f32 %v806, 1.0
  %v808 = vrcp.pop %v807
  %v809 = vmul.f32 %v807, %v808
  %v810 = vsub.f32 1.0, %v809
  %v811 = vmul.f32 %v808, %v810
  %v812 = vadd.f32 %v808, %v811
  %vm813 = vweird.f32 %v807
  %vm814 = vweird.f32 %v808
  %vm815 = vmor %vm813, %vm814
  %v816 = vsel %vm815, %v808, %v812
  %v817 = vand.u32 2147483647, %v807
  %vm818 = vcmp.eq.f32.partialorder %v817, 8.507059e+37
  %v819 = vand.u32 %v807, 2147483648
  %v820 = vor.u32 1.1754944e-38, %v819
  %v821 = vsel %vm818, %v820, %v816
  %v822 = vmul.f32 1.0, %v821
  %v823 = vmul.f32 %v822, 2.0
  %v824 = vsub.f32 %v823, 1.0
  %826 = vrot.lane.b32.xlu0 %v824, 64
  %v827 = vpop.permute.xlu0 %826
  %v829 = vmul.f32 %v789, %v827
  %831 = vrot.lane.b32.xlu0 %v829, 32
  %v832 = vpop.permute.xlu0 %831
  %s834 = scalar_lea.vmem [#allocation2], 56
  %835 = vst.msk [vmem:[%s834] sm:$0xff] %vm50, %v832
  %836 = vst.msk [vmem:[#allocation3] sm:$0xff] %vm50, %v832
  %v837 = vld [vmem:[#allocation2] sm:$0xff]
  %v838 = vld [vmem:[#allocation2 + $0x8] sm:$0xff]
  %v839 = vld [vmem:[#allocation2 + $0x10] sm:$0xff]
  %v840 = vld [vmem:[#allocation2 + $0x18] sm:$0xff]
  %v841 = vld [vmem:[#allocation2 + $0x20] sm:$0xff]
  %v842 = vld [vmem:[#allocation2 + $0x28] sm:$0xff]
  %v843 = vld [vmem:[#allocation2 + $0x30] sm:$0xff]
  %v844 = vld [vmem:[#allocation2 + $0x38] sm:$0xff]
  %v845 = vld [vmem:[%s4] sm:$0x1]
  %v847 = vperm.slane %v845, 0
  %v849 = vmul.f32 %v837, %v847
  %v850 = vmul.f32 %v838, %v847
  %v851 = vmul.f32 %v839, %v847
  %v852 = vmul.f32 %v840, %v847
  %v853 = vmul.f32 %v841, %v847
  %v854 = vmul.f32 %v842, %v847
  %v855 = vmul.f32 %v843, %v847
  %v856 = vmul.f32 %v844, %v847
  %vm857 = vcmask 130048
  %v858 = vsel %vm857, %v849, 0.0
  %859 = vadd.xlane.f32.xlu0 %v858
  %v860 = vpop.xlane.xlu0 %859
  %v861 = vsel %vm857, %v850, 0.0
  %862 = vadd.xlane.f32.xlu0 %v861
  %v863 = vpop.xlane.xlu0 %862
  %v864 = vsel %vm857, %v851, 0.0
  %865 = vadd.xlane.f32.xlu0 %v864
  %v866 = vpop.xlane.xlu0 %865
  %v867 = vsel %vm857, %v852, 0.0
  %868 = vadd.xlane.f32.xlu0 %v867
  %v869 = vpop.xlane.xlu0 %868
  %v870 = vsel %vm857, %v853, 0.0
  %871 = vadd.xlane.f32.xlu0 %v870
  %v872 = vpop.xlane.xlu0 %871
  %v873 = vsel %vm857, %v854, 0.0
  %874 = vadd.xlane.f32.xlu0 %v873
  %v875 = vpop.xlane.xlu0 %874
  %v876 = vsel %vm857, %v855, 0.0
  %877 = vadd.xlane.f32.xlu0 %v876
  %v878 = vpop.xlane.xlu0 %877
  %v879 = vsel %vm857, %v856, 0.0
  %880 = vadd.xlane.f32.xlu0 %v879
  %v881 = vpop.xlane.xlu0 %880
  %v882 = vld [vmem:[#allocation3] sm:$0xff]
  %v883 = vld [vmem:[#allocation3 + $0x8] sm:$0xff]
  %v884 = vld [vmem:[#allocation3 + $0x10] sm:$0xff]
  %v885 = vld [vmem:[#allocation3 + $0x18] sm:$0xff]
  %v886 = vld [vmem:[#allocation3 + $0x20] sm:$0xff]
  %v887 = vld [vmem:[#allocation3 + $0x28] sm:$0xff]
  %v888 = vld [vmem:[#allocation3 + $0x30] sm:$0xff]
  %v889 = vld [vmem:[#allocation3 + $0x38] sm:$0xff]
  %v890 = vld [vmem:[%s5] sm:$0x1]
  %v892 = vperm.slane %v890, 0
  %893 = vrot.lane.b32.xlu0 %v892, 16
  %v894 = vpop.permute.xlu0 %893
  %v896 = vmul.f32 %v882, %v894
  %v897 = vmul.f32 %v883, %v894
  %v898 = vmul.f32 %v884, %v894
  %v899 = vmul.f32 %v885, %v894
  %v900 = vmul.f32 %v886, %v894
  %v901 = vmul.f32 %v887, %v894
  %v902 = vmul.f32 %v888, %v894
  %v903 = vmul.f32 %v889, %v894
  %912 = vrot.lane.b32.xlu0 %v896, 112
  %v913 = vpop.permute.xlu0 %912
  %914 = vrot.lane.b32.xlu0 %v897, 112
  %v915 = vpop.permute.xlu0 %914
  %916 = vrot.lane.b32.xlu0 %v898, 112
  %v917 = vpop.permute.xlu0 %916
  %918 = vrot.lane.b32.xlu0 %v899, 112
  %v919 = vpop.permute.xlu0 %918
  %920 = vrot.lane.b32.xlu0 %v900, 112
  %v921 = vpop.permute.xlu0 %920
  %922 = vrot.lane.b32.xlu0 %v901, 112
  %v923 = vpop.permute.xlu0 %922
  %924 = vrot.lane.b32.xlu0 %v902, 112
  %v925 = vpop.permute.xlu0 %924
  %926 = vrot.lane.b32.xlu0 %v903, 112
  %v927 = vpop.permute.xlu0 %926
  %v936 = vsel %vm857, %v913, 0.0
  %937 = vadd.xlane.f32.xlu0 %v936
  %v938 = vpop.xlane.xlu0 %937
  %v939 = vsel %vm857, %v915, 0.0
  %940 = vadd.xlane.f32.xlu0 %v939
  %v941 = vpop.xlane.xlu0 %940
  %v942 = vsel %vm857, %v917, 0.0
  %943 = vadd.xlane.f32.xlu0 %v942
  %v944 = vpop.xlane.xlu0 %943
  %v945 = vsel %vm857, %v919, 0.0
  %946 = vadd.xlane.f32.xlu0 %v945
  %v947 = vpop.xlane.xlu0 %946
  %v948 = vsel %vm857, %v921, 0.0
  %949 = vadd.xlane.f32.xlu0 %v948
  %v950 = vpop.xlane.xlu0 %949
  %v951 = vsel %vm857, %v923, 0.0
  %952 = vadd.xlane.f32.xlu0 %v951
  %v953 = vpop.xlane.xlu0 %952
  %v954 = vsel %vm857, %v925, 0.0
  %955 = vadd.xlane.f32.xlu0 %v954
  %v956 = vpop.xlane.xlu0 %955
  %v957 = vsel %vm857, %v927, 0.0
  %958 = vadd.xlane.f32.xlu0 %v957
  %v959 = vpop.xlane.xlu0 %958
  %v960 = vadd.f32 %v860, %v938
  %v961 = vadd.f32 %v863, %v941
  %v962 = vadd.f32 %v866, %v944
  %v963 = vadd.f32 %v869, %v947
  %v964 = vadd.f32 %v872, %v950
  %v965 = vadd.f32 %v875, %v953
  %v966 = vadd.f32 %v878, %v956
  %v967 = vadd.f32 %v881, %v959
  %v968 = vld [vmem:[#allocation4] sm:$0x1]
  %s969 = vtos %v968
  %v970 = vstv %s969
  %v971 = vadd.f32 %v960, %v970
  %v972 = vadd.f32 %v961, %v970
  %v973 = vadd.f32 %v962, %v970
  %v974 = vadd.f32 %v963, %v970
  %v975 = vadd.f32 %v964, %v970
  %v976 = vadd.f32 %v965, %v970
  %v977 = vadd.f32 %v966, %v970
  %v978 = vadd.f32 %v967, %v970
  %v979 = vmax.f32 %v971, 0.0
  %v980 = vmax.f32 %v972, 0.0
  %v981 = vmax.f32 %v973, 0.0
  %v982 = vmax.f32 %v974, 0.0
  %v983 = vmax.f32 %v975, 0.0
  %v984 = vmax.f32 %v976, 0.0
  %v985 = vmax.f32 %v977, 0.0
  %v986 = vmax.f32 %v978, 0.0
  %v995 = vlaneseq
  %v996 = vand.u32 %v995, 127
  %v997 = vperm.slane %v979, %v996
  %v998 = vperm.slane %v980, %v996
  %v999 = vperm.slane %v981, %v996
  %v1000 = vperm.slane %v982, %v996
  %v1001 = vperm.slane %v983, %v996
  %v1002 = vperm.slane %v984, %v996
  %v1003 = vperm.slane %v985, %v996
  %v1004 = vperm.slane %v986, %v996
  %vm1005 = vcmask 1041409
  %v1006 = vsel %vm1005, %v998, %v997
  %vm1007 = vcmask 1042434
  %v1008 = vsel %vm1007, %v999, %v1006
  %vm1009 = vcmask 1043459
  %v1010 = vsel %vm1009, %v1000, %v1008
  %vm1011 = vcmask 1044484
  %v1012 = vsel %vm1011, %v1001, %v1010
  %vm1013 = vcmask 1045509
  %v1014 = vsel %vm1013, %v1002, %v1012
  %vm1015 = vcmask 1046534
  %v1016 = vsel %vm1015, %v1003, %v1014
  %vm1017 = vcmask 1047559
  %v1018 = vsel %vm1017, %v1004, %v1016
  %vm1020 = vcmask 64512
  %1021 = vst.msk [vmem:[%s9] sm:$0xff] %vm1020, %v1018
  // Predicated region
  $region38: #{net_forward_fused.1} parent=0 // pred_check
    _
  $region39: #{net_forward_fused.1} parent=0 // pred_check_branch
    %1023 = sbr.rel (0) target = $region41
  $region40: #{net_forward_fused.1} parent=0 // pred_region
    _
  $region41: #{net_forward_fused.1} parent=0 // pred_fallthru
    _
  // Predicated region
  $region42: #{net_forward_fused.1} parent=0 // pred_check
    _
  $region43: #{net_forward_fused.1} parent=0 // pred_check_branch
    %1025 = sbr.rel (0) target = $region45
  $region44: #{net_forward_fused.1} parent=0 // pred_region
    _
  $region45: #{net_forward_fused.1} parent=0 // pred_fallthru
    _

</llo_original>
